<compile_context>
chip_gen: v5e
topology: v5e:2x2
jax: 0.10.0
libtpu: 0.0.40
codegen_flags: <defaults>
</compile_context>

<pallas_src>
import math

import jax
import jax.numpy as jnp
from jax.experimental import pallas as pl
from jax.experimental.pallas import tpu as pltpu


def _round_up(n, m):
    return ((n + m - 1) // m) * m


def make_kernel(num_heads, kvq_size, hidden_size, nhk_pad, eps=1e-5):
    NH, K, H = num_heads, kvq_size, hidden_size
    NHK = NH * K
    NHKp = nhk_pad
    scale = 1.0 / math.sqrt(K)
    inv_h = 1.0 / H  # true hidden size (padded lanes are exactly zero)

    def layer_norm(r, g, b):
        # Padded lanes of r are exactly zero, so lane sums equal sums over the
        # true H entries. E[x^2] - mu^2 form avoids masking; clamp to >= 0 to
        # guard against catastrophic cancellation -> rsqrt(NaN).
        mu = jnp.sum(r, axis=-1, keepdims=True) * inv_h
        var = jnp.sum(r * r, axis=-1, keepdims=True) * inv_h - mu * mu
        var = jnp.maximum(var, 0.0)
        return (r - mu) * jax.lax.rsqrt(var + eps) * g + b

    def kernel(x_ref, wqkv_ref, bqkv_ref, wa_ref, ba_ref, g1_ref, be1_ref,
               wf_ref, bf_ref, g2_ref, be2_ref, out_ref, zcat_ref):
        bb, S, Hp = x_ref.shape
        R = bb * S

        xb = x_ref[...].reshape(R, Hp)          # bf16, layout-trivial collapse
        x2f = xb.astype(jnp.float32)            # single upcast for residual/LN

        # ---- fused q/k/v projection for all heads: one wide MXU matmul ----
        qkv = jnp.dot(xb, wqkv_ref[...],
                      preferred_element_type=jnp.float32) + bqkv_ref[...]
        qkv = qkv.reshape(bb, S, 3 * NHKp)      # f32; only full copy kept live

        # Zero the padded tail of the head-concat scratch so the (zero)
        # aggregation-weight pad rows never multiply uninitialized NaNs.
        if NHKp > NHK:
            zcat_ref[:, NHK:] = jnp.zeros((R, NHKp - NHK), jnp.bfloat16)

        # ---- per-head scaled dot-product attention (batched over bb) ----
        # Each head's output is written straight into the head-major scratch:
        # no concat, per-head temporaries die each iteration.
        # TODO(synk): flash-style KV tiling before scaling S.
        for n in range(NH):                     # static unroll, NH is small
            q = qkv[:, :, n * K:(n + 1) * K].astype(jnp.bfloat16)
            k = qkv[:, :, NHKp + n * K:NHKp + (n + 1) * K].astype(jnp.bfloat16)
            v = qkv[:, :, 2 * NHKp + n * K:
                    2 * NHKp + (n + 1) * K].astype(jnp.bfloat16)
            s = jnp.einsum("bqc,btc->bqt", q, k,
                           preferred_element_type=jnp.float32) * scale
            s = s - jnp.max(s, axis=-1, keepdims=True)
            p = jnp.exp(s)
            inv = pl.reciprocal(jnp.sum(p, axis=-1, keepdims=True), approx=True)
            attn = (p * inv).astype(jnp.bfloat16)
            z = jnp.einsum("bqt,btc->bqc", attn, v,
                           preferred_element_type=jnp.float32)      # (bb,S,K)
            zcat_ref[:, n * K:(n + 1) * K] = z.reshape(R, K).astype(jnp.bfloat16)

        # ---- ONE aggregation matmul with the full NHKp-wide contraction ----
        y = jnp.dot(zcat_ref[...], wa_ref[...],
                    preferred_element_type=jnp.float32) + ba_ref[...]   # (R,Hp)

        # ---- residual + LayerNorm1 (f32) ----
        y1 = layer_norm(y + x2f, g1_ref[...], be1_ref[...])

        # ---- FFNN + residual + LayerNorm2 ----
        z2 = jnp.dot(y1.astype(jnp.bfloat16), wf_ref[...],
                     preferred_element_type=jnp.float32) + bf_ref[...]
        out2 = layer_norm(z2 + y1, g2_ref[...], be2_ref[...])

        out_ref[...] = out2.reshape(bb, S, Hp).astype(out_ref.dtype)

    return kernel


def pack_params(p, *, hidden_size, kvq_size, num_heads, h_pad, nhk_pad,
                wdtype=jnp.bfloat16):
    """Fuse / pad / cast the per-head parameters for the kernel."""
    H, K, NH = hidden_size, kvq_size, num_heads
    NHK = NH * K
    ph = h_pad - H
    pn = nhk_pad - NHK

    def seg_w(w):  # (NH, H, K) -> (Hp, NHKp), head-major columns, zero pad
        m = jnp.transpose(w, (1, 0, 2)).reshape(H, NHK)
        return jnp.pad(m, ((0, ph), (0, pn)))

    w_qkv = jnp.concatenate([seg_w(p["wq"]), seg_w(p["wk"]), seg_w(p["wv"])],
                            axis=1).astype(wdtype)          # (Hp, 3*NHKp) bf16

    def seg_b(b):  # (NH, 1, K) -> (1, NHKp) f32
        return jnp.pad(b.reshape(1, NHK), ((0, 0), (0, pn)))

    b_qkv = jnp.concatenate([seg_b(p["bq"]), seg_b(p["bk"]), seg_b(p["bv"])],
                            axis=1)                         # (1, 3*NHKp) f32

    w_a = jnp.pad(p["wa"].reshape(NHK, H), ((0, pn), (0, ph))).astype(wdtype)
    w_f = jnp.pad(p["wf"], ((0, ph), (0, ph))).astype(wdtype)

    def pad_row(v):  # (1, H) -> (1, Hp), zero pad, keep f32
        return jnp.pad(v, ((0, 0), (0, ph)))

    return (w_qkv, b_qkv, w_a, pad_row(p["ba"]),
            pad_row(p["g1"]), pad_row(p["be1"]),
            w_f, pad_row(p["bf"]),
            pad_row(p["g2"]), pad_row(p["be2"]))


def multi_head_transformer_vector_layer(x, params, *, num_heads, kvq_size,
                                         block_b=None):
    """x: (B, S, H) f32. params: dict of stacked per-head + layer weights."""
    B, S, H = x.shape
    out_dtype = x.dtype
    NH, K = num_heads, kvq_size
    NHK = NH * K
    Hp = _round_up(max(H, 128), 128)          # lane-dense activation blocks
    NHKp = _round_up(max(NHK, 128), 128)      # lane-dense qkv segments / agg contraction

    # DMA activations in bf16 (halves x HBM traffic); kernel upcasts once.
    x_p = jnp.pad(x.astype(jnp.bfloat16), ((0, 0), (0, 0), (0, Hp - H)))
    packed = pack_params(params, hidden_size=H, kvq_size=kvq_size,
                         num_heads=num_heads, h_pad=Hp, nhk_pad=NHKp)

    # ---- explicit VMEM budgeting ----
    try:
        vmem_cap = int(pltpu.get_tpu_info().vmem_capacity_bytes)
        if vmem_cap <= 0:
            vmem_cap = 64 * 1024 * 1024
    except Exception:
        vmem_cap = 64 * 1024 * 1024           # conservative (v7x physical)
    vmem_budget = int(vmem_cap * 0.85)

    # resident weights (bf16) + f32 bias/affine rows
    weight_bytes = (2 * (Hp * 3 * NHKp + NHKp * Hp + Hp * Hp)
                    + 4 * (3 * NHKp + 7 * Hp))
    # per activation row: x/out double buffers, f32 qkv, LN temps, scratch, scores
    per_row_bytes = 32 * Hp + 14 * NHKp + 8 * S
    denom = max(1, int(per_row_bytes * S * 1.5))     # 1.5x safety factor
    max_bb = max(1, (vmem_budget - weight_bytes) // denom)

    if block_b is None:
        cands = [d for d in range(1, B + 1) if B % d == 0 and d <= max_bb]
        if not cands:
            cands = [1]
        good = [d for d in cands if d * S >= 512]    # fill MXU rows (>=512)
        block_b = min(good) if good else max(cands)  # else maximize per-step work
    assert B % block_b == 0, "block_b must divide B"

    kernel = make_kernel(num_heads, kvq_size, H, NHKp)

    # Grid-invariant weights: copied to VMEM once, single-buffered.
    wspec = pl.BlockSpec(memory_space=pltpu.MemorySpace.VMEM)

    flops = int(2 * B * S * (Hp * 3 * NHKp + NHKp * Hp + Hp * Hp)
                + 4 * NH * B * S * S * K)
    transcendentals = int(NH * B * S * S + 4 * B * S)
    bytes_accessed = int(B * S * Hp * 2 + B * S * Hp * 4 + weight_bytes)
    cost = pl.CostEstimate(flops=flops, transcendentals=transcendentals,
                           bytes_accessed=bytes_accessed)

    grid = (B // block_b,)
    out_p = pl.pallas_call(
        kernel,
        out_shape=jax.ShapeDtypeStruct((B, S, Hp), out_dtype),
        grid=grid,
        in_specs=[pl.BlockSpec((block_b, S, Hp), lambda b: (b, 0, 0))]
                 + [wspec] * len(packed),
        out_specs=pl.BlockSpec((block_b, S, Hp), lambda b: (b, 0, 0)),
        scratch_shapes=[pltpu.VMEM((block_b * S, NHKp), jnp.bfloat16)],
        compiler_params=pltpu.CompilerParams(
            dimension_semantics=("parallel",),
            vmem_limit_bytes=vmem_budget),
        cost_estimate=cost,
    )(x_p, *packed)

    return out_p[:, :, :H]


def reference_forward(x, params, *, num_heads, kvq_size, eps=1e-5):
    """Pure-JAX f32 reference mirroring the PyTorch forward."""
    scale = 1.0 / math.sqrt(kvq_size)
    zs = []
    for n in range(num_heads):
        q = x @ params["wq"][n] + params["bq"][n]
        k = x @ params["wk"][n] + params["bk"][n]
        v = x @ params["wv"][n] + params["bv"][n]
        s = jnp.einsum("bsk,btk->bst", q, k) * scale
        attn = jax.nn.softmax(s, axis=-1)
        zs.append(jnp.einsum("bst,btk->bsk", attn, v))
    ycat = jnp.concatenate(zs, axis=-1)                       # (B, S, NH*K)
    wa_cat = params["wa"].reshape(num_heads * kvq_size, -1)   # (NH*K, H)
    y = ycat @ wa_cat + params["ba"]

    def ln(t, g, b):
        mu = jnp.mean(t, axis=-1, keepdims=True)
        var = jnp.mean((t - mu) ** 2, axis=-1, keepdims=True)
        return (t - mu) * jax.lax.rsqrt(var + eps) * g + b

    y = ln(y + x, params["g1"], params["be1"])
    z = y @ params["wf"] + params["bf"]
    return ln(z + y, params["g2"], params["be2"])


def init_params(key, hidden_size, kvq_size, num_heads):
    ks = jax.random.split(key, 16)
    f32 = jnp.float32
    H, K, NH = hidden_size, kvq_size, num_heads
    p = {
        # per-head q/k/v projections, stored as (NH, H, K) / (NH, 1, K)
        "wq": 0.1 * jax.random.normal(ks[0], (NH, H, K), f32),
        "bq": 0.1 * jax.random.normal(ks[1], (NH, 1, K), f32),
        "wk": 0.1 * jax.random.normal(ks[2], (NH, H, K), f32),
        "bk": 0.1 * jax.random.normal(ks[3], (NH, 1, K), f32),
        "wv": 0.1 * jax.random.normal(ks[4], (NH, H, K), f32),
        "bv": 0.1 * jax.random.normal(ks[5], (NH, 1, K), f32),
        # aggregation Linear(NH*K -> H), stored per-head as (NH, K, H)
        "wa": 0.1 * jax.random.normal(ks[6], (NH, K, H), f32),
        "ba": 0.1 * jax.random.normal(ks[7], (1, H), f32),
        # LayerNorm1 affine
        "g1": 1.0 + 0.01 * jax.random.normal(ks[8], (1, H), f32),
        "be1": 0.01 * jax.random.normal(ks[9], (1, H), f32),
        # FFNN Linear(H -> H)
        "wf": 0.1 * jax.random.normal(ks[10], (H, H), f32),
        "bf": 0.1 * jax.random.normal(ks[11], (1, H), f32),
        # LayerNorm2 affine
        "g2": 1.0 + 0.01 * jax.random.normal(ks[12], (1, H), f32),
        "be2": 0.01 * jax.random.normal(ks[13], (1, H), f32),
    }
    return p


if __name__ == "__main__":
    B, S, H, K, NH = 4, 16, 32, 16, 4

    key = jax.random.PRNGKey(0)
    kx, kp = jax.random.split(key)
    x = jax.random.normal(kx, (B, S, H), jnp.float32)
    params = init_params(kp, H, K, NH)

    out = multi_head_transformer_vector_layer(x, params, num_heads=NH, kvq_size=K)
    out = jax.block_until_ready(out)

    ref = reference_forward(x, params, num_heads=NH, kvq_size=K)
    assert out.shape == (B, S, H)
    # bf16 activations/MXU operands + approx reciprocal vs. pure-f32 reference
    # => loose tolerance; structural bugs would show up as O(1) errors.
    err = jnp.max(jnp.abs(out - ref))
    assert jnp.allclose(out, ref, rtol=1e-1, atol=1e-1), f"max abs diff {err}"

    print("KERNEL_OK")
</pallas_src>

<mosaic_0001>
module attributes {stable_mosaic.version = 11 : i64} {
  func.func @kernel(%arg0: i32, %arg1: memref<4x16x128xbf16, #tpu.memory_space<vmem>>, %arg2: memref<128x384xbf16, #tpu.memory_space<vmem>>, %arg3: memref<1x384xf32, #tpu.memory_space<vmem>>, %arg4: memref<128x128xbf16, #tpu.memory_space<vmem>>, %arg5: memref<1x128xf32, #tpu.memory_space<vmem>>, %arg6: memref<1x128xf32, #tpu.memory_space<vmem>>, %arg7: memref<1x128xf32, #tpu.memory_space<vmem>>, %arg8: memref<128x128xbf16, #tpu.memory_space<vmem>>, %arg9: memref<1x128xf32, #tpu.memory_space<vmem>>, %arg10: memref<1x128xf32, #tpu.memory_space<vmem>>, %arg11: memref<1x128xf32, #tpu.memory_space<vmem>>, %arg12: memref<4x16x128xf32, #tpu.memory_space<vmem>>, %arg13: memref<64x128xbf16, #tpu.memory_space<vmem>>) attributes {dimension_semantics = [#tpu.dimension_semantics<parallel>], iteration_bounds = array<i64: 1>, scalar_prefetch = 0 : i64, scratch_operands = 1 : i64, tpu.core_type = #tpu.core_type<tc>, window_params = [{transform_indices = @transform_0, window_bounds = array<i64: 4, 16, 128>}, {pipeline_mode = #tpu.pipeline_mode<synchronous>, transform_indices = @transform_1, window_bounds = array<i64: 128, 384>}, {pipeline_mode = #tpu.pipeline_mode<synchronous>, transform_indices = @transform_2, window_bounds = array<i64: 1, 384>}, {pipeline_mode = #tpu.pipeline_mode<synchronous>, transform_indices = @transform_3, window_bounds = array<i64: 128, 128>}, {pipeline_mode = #tpu.pipeline_mode<synchronous>, transform_indices = @transform_4, window_bounds = array<i64: 1, 128>}, {pipeline_mode = #tpu.pipeline_mode<synchronous>, transform_indices = @transform_5, window_bounds = array<i64: 1, 128>}, {pipeline_mode = #tpu.pipeline_mode<synchronous>, transform_indices = @transform_6, window_bounds = array<i64: 1, 128>}, {pipeline_mode = #tpu.pipeline_mode<synchronous>, transform_indices = @transform_7, window_bounds = array<i64: 128, 128>}, {pipeline_mode = #tpu.pipeline_mode<synchronous>, transform_indices = @transform_8, window_bounds = array<i64: 1, 128>}, {pipeline_mode = #tpu.pipeline_mode<synchronous>, transform_indices = @transform_9, window_bounds = array<i64: 1, 128>}, {pipeline_mode = #tpu.pipeline_mode<synchronous>, transform_indices = @transform_10, window_bounds = array<i64: 1, 128>}, {transform_indices = @transform_11, window_bounds = array<i64: 4, 16, 128>}]} {
    %c0 = arith.constant 0 : index
    %c0_0 = arith.constant 0 : index
    %c0_1 = arith.constant 0 : index
    %0 = vector.load %arg1[%c0, %c0_0, %c0_1] : memref<4x16x128xbf16, #tpu.memory_space<vmem>>, vector<4x16x128xbf16>
    %1 = vector.shape_cast %0 : vector<4x16x128xbf16> to vector<64x128xbf16>
    %2 = arith.extf %1 : vector<64x128xbf16> to vector<64x128xf32>
    %c0_2 = arith.constant 0 : index
    %c0_3 = arith.constant 0 : index
    %3 = vector.load %arg2[%c0_2, %c0_3] : memref<128x384xbf16, #tpu.memory_space<vmem>>, vector<128x384xbf16>
    %cst = arith.constant dense<0.000000e+00> : vector<64x384xf32>
    %4 = tpu.matmul %1, %3, %cst {dimension_numbers = #tpu.dot_dimension_numbers<[1], [0], [0], [1], [0, 0, 1, 1], [], []>} : vector<64x128xbf16>, vector<128x384xbf16>, vector<64x384xf32> -> vector<64x384xf32>
    %c0_4 = arith.constant 0 : index
    %c0_5 = arith.constant 0 : index
    %5 = vector.load %arg3[%c0_4, %c0_5] : memref<1x384xf32, #tpu.memory_space<vmem>>, vector<1x384xf32>
    %6 = vector.broadcast %5 : vector<1x384xf32> to vector<64x384xf32>
    %7 = arith.addf %4, %6 : vector<64x384xf32>
    %8 = vector.shape_cast %7 : vector<64x384xf32> to vector<4x16x384xf32>
    %cst_6 = arith.constant 0.000000e+00 : bf16
    %9 = vector.broadcast %cst_6 : bf16 to vector<64x64xbf16>
    %c0_7 = arith.constant 0 : index
    %c64 = arith.constant 64 : index
    %10 = vector.load %arg13[%c0_7, %c64] : memref<64x128xbf16, #tpu.memory_space<vmem>>, vector<64x64xbf16>
    tpu.vector_store %arg13[%c0_7, %c64], %9 {strides = array<i32>} : memref<64x128xbf16, #tpu.memory_space<vmem>>, vector<64x64xbf16>,
    %11 = vector.extract_strided_slice %8 {offsets = [0, 0, 0], sizes = [4, 16, 16], strides = [1, 1, 1]} : vector<4x16x384xf32> to vector<4x16x16xf32>
    %12 = arith.truncf %11 : vector<4x16x16xf32> to vector<4x16x16xbf16>
    %13 = vector.extract_strided_slice %8 {offsets = [0, 0, 128], sizes = [4, 16, 16], strides = [1, 1, 1]} : vector<4x16x384xf32> to vector<4x16x16xf32>
    %14 = arith.truncf %13 : vector<4x16x16xf32> to vector<4x16x16xbf16>
    %15 = vector.extract_strided_slice %8 {offsets = [0, 0, 256], sizes = [4, 16, 16], strides = [1, 1, 1]} : vector<4x16x384xf32> to vector<4x16x16xf32>
    %16 = arith.truncf %15 : vector<4x16x16xf32> to vector<4x16x16xbf16>
    "tpu.trace_start"() <{level = 10 : i32, message = "bqc,btc->bqt"}> : () -> ()
    %cst_8 = arith.constant dense<0.000000e+00> : vector<4x16x16xf32>
    %17 = tpu.matmul %12, %14, %cst_8 {dimension_numbers = #tpu.dot_dimension_numbers<[2], [2], [1], [1], [0, 0, 0, 1, 1, 1], [0], [0]>} : vector<4x16x16xbf16>, vector<4x16x16xbf16>, vector<4x16x16xf32> -> vector<4x16x16xf32>
    "tpu.trace_stop"() : () -> ()
    %cst_9 = arith.constant 2.500000e-01 : f32
    %18 = vector.broadcast %cst_9 : f32 to vector<4x16x16xf32>
    %19 = arith.mulf %17, %18 : vector<4x16x16xf32>
    %cst_10 = arith.constant dense<0xFF800000> : vector<4x16xf32>
    %20 = vector.multi_reduction <maximumf>, %19, %cst_10 [2] : vector<4x16x16xf32> to vector<4x16xf32>
    %21 = vector.shape_cast %20 : vector<4x16xf32> to vector<4x16x1xf32>
    %22 = vector.broadcast %21 : vector<4x16x1xf32> to vector<4x16x16xf32>
    %23 = arith.subf %19, %22 : vector<4x16x16xf32>
    %24 = math.exp %23 : vector<4x16x16xf32>
    %cst_11 = arith.constant dense<0.000000e+00> : vector<4x16xf32>
    %25 = vector.multi_reduction <add>, %24, %cst_11 [2] : vector<4x16x16xf32> to vector<4x16xf32>
    %26 = vector.shape_cast %25 : vector<4x16xf32> to vector<4x16x1xf32>
    %27 = tpu.reciprocal %26 {approx = true} : vector<4x16x1xf32> -> vector<4x16x1xf32>
    %28 = vector.broadcast %27 : vector<4x16x1xf32> to vector<4x16x16xf32>
    %29 = arith.mulf %24, %28 : vector<4x16x16xf32>
    %30 = arith.truncf %29 : vector<4x16x16xf32> to vector<4x16x16xbf16>
    "tpu.trace_start"() <{level = 10 : i32, message = "bqt,btc->bqc"}> : () -> ()
    %cst_12 = arith.constant dense<0.000000e+00> : vector<4x16x16xf32>
    %31 = tpu.matmul %30, %16, %cst_12 {dimension_numbers = #tpu.dot_dimension_numbers<[2], [1], [1], [2], [0, 0, 0, 1, 1, 2], [0], [0]>} : vector<4x16x16xbf16>, vector<4x16x16xbf16>, vector<4x16x16xf32> -> vector<4x16x16xf32>
    "tpu.trace_stop"() : () -> ()
    %32 = vector.shape_cast %31 : vector<4x16x16xf32> to vector<64x16xf32>
    %33 = arith.truncf %32 : vector<64x16xf32> to vector<64x16xbf16>
    %c0_13 = arith.constant 0 : index
    %c0_14 = arith.constant 0 : index
    %34 = vector.load %arg13[%c0_13, %c0_14] : memref<64x128xbf16, #tpu.memory_space<vmem>>, vector<64x16xbf16>
    tpu.vector_store %arg13[%c0_13, %c0_14], %33 {strides = array<i32>} : memref<64x128xbf16, #tpu.memory_space<vmem>>, vector<64x16xbf16>,
    %35 = vector.extract_strided_slice %8 {offsets = [0, 0, 16], sizes = [4, 16, 16], strides = [1, 1, 1]} : vector<4x16x384xf32> to vector<4x16x16xf32>
    %36 = arith.truncf %35 : vector<4x16x16xf32> to vector<4x16x16xbf16>
    %37 = vector.extract_strided_slice %8 {offsets = [0, 0, 144], sizes = [4, 16, 16], strides = [1, 1, 1]} : vector<4x16x384xf32> to vector<4x16x16xf32>
    %38 = arith.truncf %37 : vector<4x16x16xf32> to vector<4x16x16xbf16>
    %39 = vector.extract_strided_slice %8 {offsets = [0, 0, 272], sizes = [4, 16, 16], strides = [1, 1, 1]} : vector<4x16x384xf32> to vector<4x16x16xf32>
    %40 = arith.truncf %39 : vector<4x16x16xf32> to vector<4x16x16xbf16>
    "tpu.trace_start"() <{level = 10 : i32, message = "bqc,btc->bqt"}> : () -> ()
    %cst_15 = arith.constant dense<0.000000e+00> : vector<4x16x16xf32>
    %41 = tpu.matmul %36, %38, %cst_15 {dimension_numbers = #tpu.dot_dimension_numbers<[2], [2], [1], [1], [0, 0, 0, 1, 1, 1], [0], [0]>} : vector<4x16x16xbf16>, vector<4x16x16xbf16>, vector<4x16x16xf32> -> vector<4x16x16xf32>
    "tpu.trace_stop"() : () -> ()
    %cst_16 = arith.constant 2.500000e-01 : f32
    %42 = vector.broadcast %cst_16 : f32 to vector<4x16x16xf32>
    %43 = arith.mulf %41, %42 : vector<4x16x16xf32>
    %cst_17 = arith.constant dense<0xFF800000> : vector<4x16xf32>
    %44 = vector.multi_reduction <maximumf>, %43, %cst_17 [2] : vector<4x16x16xf32> to vector<4x16xf32>
    %45 = vector.shape_cast %44 : vector<4x16xf32> to vector<4x16x1xf32>
    %46 = vector.broadcast %45 : vector<4x16x1xf32> to vector<4x16x16xf32>
    %47 = arith.subf %43, %46 : vector<4x16x16xf32>
    %48 = math.exp %47 : vector<4x16x16xf32>
    %cst_18 = arith.constant dense<0.000000e+00> : vector<4x16xf32>
    %49 = vector.multi_reduction <add>, %48, %cst_18 [2] : vector<4x16x16xf32> to vector<4x16xf32>
    %50 = vector.shape_cast %49 : vector<4x16xf32> to vector<4x16x1xf32>
    %51 = tpu.reciprocal %50 {approx = true} : vector<4x16x1xf32> -> vector<4x16x1xf32>
    %52 = vector.broadcast %51 : vector<4x16x1xf32> to vector<4x16x16xf32>
    %53 = arith.mulf %48, %52 : vector<4x16x16xf32>
    %54 = arith.truncf %53 : vector<4x16x16xf32> to vector<4x16x16xbf16>
    "tpu.trace_start"() <{level = 10 : i32, message = "bqt,btc->bqc"}> : () -> ()
    %cst_19 = arith.constant dense<0.000000e+00> : vector<4x16x16xf32>
    %55 = tpu.matmul %54, %40, %cst_19 {dimension_numbers = #tpu.dot_dimension_numbers<[2], [1], [1], [2], [0, 0, 0, 1, 1, 2], [0], [0]>} : vector<4x16x16xbf16>, vector<4x16x16xbf16>, vector<4x16x16xf32> -> vector<4x16x16xf32>
    "tpu.trace_stop"() : () -> ()
    %56 = vector.shape_cast %55 : vector<4x16x16xf32> to vector<64x16xf32>
    %57 = arith.truncf %56 : vector<64x16xf32> to vector<64x16xbf16>
    %c0_20 = arith.constant 0 : index
    %c16 = arith.constant 16 : index
    %58 = vector.load %arg13[%c0_20, %c16] : memref<64x128xbf16, #tpu.memory_space<vmem>>, vector<64x16xbf16>
    tpu.vector_store %arg13[%c0_20, %c16], %57 {strides = array<i32>} : memref<64x128xbf16, #tpu.memory_space<vmem>>, vector<64x16xbf16>,
    %59 = vector.extract_strided_slice %8 {offsets = [0, 0, 32], sizes = [4, 16, 16], strides = [1, 1, 1]} : vector<4x16x384xf32> to vector<4x16x16xf32>
    %60 = arith.truncf %59 : vector<4x16x16xf32> to vector<4x16x16xbf16>
    %61 = vector.extract_strided_slice %8 {offsets = [0, 0, 160], sizes = [4, 16, 16], strides = [1, 1, 1]} : vector<4x16x384xf32> to vector<4x16x16xf32>
    %62 = arith.truncf %61 : vector<4x16x16xf32> to vector<4x16x16xbf16>
    %63 = vector.extract_strided_slice %8 {offsets = [0, 0, 288], sizes = [4, 16, 16], strides = [1, 1, 1]} : vector<4x16x384xf32> to vector<4x16x16xf32>
    %64 = arith.truncf %63 : vector<4x16x16xf32> to vector<4x16x16xbf16>
    "tpu.trace_start"() <{level = 10 : i32, message = "bqc,btc->bqt"}> : () -> ()
    %cst_21 = arith.constant dense<0.000000e+00> : vector<4x16x16xf32>
    %65 = tpu.matmul %60, %62, %cst_21 {dimension_numbers = #tpu.dot_dimension_numbers<[2], [2], [1], [1], [0, 0, 0, 1, 1, 1], [0], [0]>} : vector<4x16x16xbf16>, vector<4x16x16xbf16>, vector<4x16x16xf32> -> vector<4x16x16xf32>
    "tpu.trace_stop"() : () -> ()
    %cst_22 = arith.constant 2.500000e-01 : f32
    %66 = vector.broadcast %cst_22 : f32 to vector<4x16x16xf32>
    %67 = arith.mulf %65, %66 : vector<4x16x16xf32>
    %cst_23 = arith.constant dense<0xFF800000> : vector<4x16xf32>
    %68 = vector.multi_reduction <maximumf>, %67, %cst_23 [2] : vector<4x16x16xf32> to vector<4x16xf32>
    %69 = vector.shape_cast %68 : vector<4x16xf32> to vector<4x16x1xf32>
    %70 = vector.broadcast %69 : vector<4x16x1xf32> to vector<4x16x16xf32>
    %71 = arith.subf %67, %70 : vector<4x16x16xf32>
    %72 = math.exp %71 : vector<4x16x16xf32>
    %cst_24 = arith.constant dense<0.000000e+00> : vector<4x16xf32>
    %73 = vector.multi_reduction <add>, %72, %cst_24 [2] : vector<4x16x16xf32> to vector<4x16xf32>
    %74 = vector.shape_cast %73 : vector<4x16xf32> to vector<4x16x1xf32>
    %75 = tpu.reciprocal %74 {approx = true} : vector<4x16x1xf32> -> vector<4x16x1xf32>
    %76 = vector.broadcast %75 : vector<4x16x1xf32> to vector<4x16x16xf32>
    %77 = arith.mulf %72, %76 : vector<4x16x16xf32>
    %78 = arith.truncf %77 : vector<4x16x16xf32> to vector<4x16x16xbf16>
    "tpu.trace_start"() <{level = 10 : i32, message = "bqt,btc->bqc"}> : () -> ()
    %cst_25 = arith.constant dense<0.000000e+00> : vector<4x16x16xf32>
    %79 = tpu.matmul %78, %64, %cst_25 {dimension_numbers = #tpu.dot_dimension_numbers<[2], [1], [1], [2], [0, 0, 0, 1, 1, 2], [0], [0]>} : vector<4x16x16xbf16>, vector<4x16x16xbf16>, vector<4x16x16xf32> -> vector<4x16x16xf32>
    "tpu.trace_stop"() : () -> ()
    %80 = vector.shape_cast %79 : vector<4x16x16xf32> to vector<64x16xf32>
    %81 = arith.truncf %80 : vector<64x16xf32> to vector<64x16xbf16>
    %c0_26 = arith.constant 0 : index
    %c32 = arith.constant 32 : index
    %82 = vector.load %arg13[%c0_26, %c32] : memref<64x128xbf16, #tpu.memory_space<vmem>>, vector<64x16xbf16>
    tpu.vector_store %arg13[%c0_26, %c32], %81 {strides = array<i32>} : memref<64x128xbf16, #tpu.memory_space<vmem>>, vector<64x16xbf16>,
    %83 = vector.extract_strided_slice %8 {offsets = [0, 0, 48], sizes = [4, 16, 16], strides = [1, 1, 1]} : vector<4x16x384xf32> to vector<4x16x16xf32>
    %84 = arith.truncf %83 : vector<4x16x16xf32> to vector<4x16x16xbf16>
    %85 = vector.extract_strided_slice %8 {offsets = [0, 0, 176], sizes = [4, 16, 16], strides = [1, 1, 1]} : vector<4x16x384xf32> to vector<4x16x16xf32>
    %86 = arith.truncf %85 : vector<4x16x16xf32> to vector<4x16x16xbf16>
    %87 = vector.extract_strided_slice %8 {offsets = [0, 0, 304], sizes = [4, 16, 16], strides = [1, 1, 1]} : vector<4x16x384xf32> to vector<4x16x16xf32>
    %88 = arith.truncf %87 : vector<4x16x16xf32> to vector<4x16x16xbf16>
    "tpu.trace_start"() <{level = 10 : i32, message = "bqc,btc->bqt"}> : () -> ()
    %cst_27 = arith.constant dense<0.000000e+00> : vector<4x16x16xf32>
    %89 = tpu.matmul %84, %86, %cst_27 {dimension_numbers = #tpu.dot_dimension_numbers<[2], [2], [1], [1], [0, 0, 0, 1, 1, 1], [0], [0]>} : vector<4x16x16xbf16>, vector<4x16x16xbf16>, vector<4x16x16xf32> -> vector<4x16x16xf32>
    "tpu.trace_stop"() : () -> ()
    %cst_28 = arith.constant 2.500000e-01 : f32
    %90 = vector.broadcast %cst_28 : f32 to vector<4x16x16xf32>
    %91 = arith.mulf %89, %90 : vector<4x16x16xf32>
    %cst_29 = arith.constant dense<0xFF800000> : vector<4x16xf32>
    %92 = vector.multi_reduction <maximumf>, %91, %cst_29 [2] : vector<4x16x16xf32> to vector<4x16xf32>
    %93 = vector.shape_cast %92 : vector<4x16xf32> to vector<4x16x1xf32>
    %94 = vector.broadcast %93 : vector<4x16x1xf32> to vector<4x16x16xf32>
    %95 = arith.subf %91, %94 : vector<4x16x16xf32>
    %96 = math.exp %95 : vector<4x16x16xf32>
    %cst_30 = arith.constant dense<0.000000e+00> : vector<4x16xf32>
    %97 = vector.multi_reduction <add>, %96, %cst_30 [2] : vector<4x16x16xf32> to vector<4x16xf32>
    %98 = vector.shape_cast %97 : vector<4x16xf32> to vector<4x16x1xf32>
    %99 = tpu.reciprocal %98 {approx = true} : vector<4x16x1xf32> -> vector<4x16x1xf32>
    %100 = vector.broadcast %99 : vector<4x16x1xf32> to vector<4x16x16xf32>
    %101 = arith.mulf %96, %100 : vector<4x16x16xf32>
    %102 = arith.truncf %101 : vector<4x16x16xf32> to vector<4x16x16xbf16>
    "tpu.trace_start"() <{level = 10 : i32, message = "bqt,btc->bqc"}> : () -> ()
    %cst_31 = arith.constant dense<0.000000e+00> : vector<4x16x16xf32>
    %103 = tpu.matmul %102, %88, %cst_31 {dimension_numbers = #tpu.dot_dimension_numbers<[2], [1], [1], [2], [0, 0, 0, 1, 1, 2], [0], [0]>} : vector<4x16x16xbf16>, vector<4x16x16xbf16>, vector<4x16x16xf32> -> vector<4x16x16xf32>
    "tpu.trace_stop"() : () -> ()
    %104 = vector.shape_cast %103 : vector<4x16x16xf32> to vector<64x16xf32>
    %105 = arith.truncf %104 : vector<64x16xf32> to vector<64x16xbf16>
    %c0_32 = arith.constant 0 : index
    %c48 = arith.constant 48 : index
    %106 = vector.load %arg13[%c0_32, %c48] : memref<64x128xbf16, #tpu.memory_space<vmem>>, vector<64x16xbf16>
    tpu.vector_store %arg13[%c0_32, %c48], %105 {strides = array<i32>} : memref<64x128xbf16, #tpu.memory_space<vmem>>, vector<64x16xbf16>,
    %c0_33 = arith.constant 0 : index
    %c0_34 = arith.constant 0 : index
    %107 = vector.load %arg13[%c0_33, %c0_34] : memref<64x128xbf16, #tpu.memory_space<vmem>>, vector<64x128xbf16>
    %c0_35 = arith.constant 0 : index
    %c0_36 = arith.constant 0 : index
    %108 = vector.load %arg4[%c0_35, %c0_36] : memref<128x128xbf16, #tpu.memory_space<vmem>>, vector<128x128xbf16>
    %cst_37 = arith.constant dense<0.000000e+00> : vector<64x128xf32>
    %109 = tpu.matmul %107, %108, %cst_37 {dimension_numbers = #tpu.dot_dimension_numbers<[1], [0], [0], [1], [0, 0, 1, 1], [], []>} : vector<64x128xbf16>, vector<128x128xbf16>, vector<64x128xf32> -> vector<64x128xf32>
    %c0_38 = arith.constant 0 : index
    %c0_39 = arith.constant 0 : index
    %110 = vector.load %arg5[%c0_38, %c0_39] : memref<1x128xf32, #tpu.memory_space<vmem>>, vector<1x128xf32>
    %111 = vector.broadcast %110 : vector<1x128xf32> to vector<64x128xf32>
    %112 = arith.addf %109, %111 : vector<64x128xf32>
    %113 = arith.addf %112, %2 : vector<64x128xf32>
    %c0_40 = arith.constant 0 : index
    %c0_41 = arith.constant 0 : index
    %114 = vector.load %arg6[%c0_40, %c0_41] : memref<1x128xf32, #tpu.memory_space<vmem>>, vector<1x128xf32>
    %c0_42 = arith.constant 0 : index
    %c0_43 = arith.constant 0 : index
    %115 = vector.load %arg7[%c0_42, %c0_43] : memref<1x128xf32, #tpu.memory_space<vmem>>, vector<1x128xf32>
    %cst_44 = arith.constant dense<0.000000e+00> : vector<64xf32>
    %116 = vector.multi_reduction <add>, %113, %cst_44 [1] : vector<64x128xf32> to vector<64xf32>
    %117 = vector.shape_cast %116 : vector<64xf32> to vector<64x1xf32>
    %cst_45 = arith.constant 3.125000e-02 : f32
    %118 = vector.broadcast %cst_45 : f32 to vector<64x1xf32>
    %119 = arith.mulf %117, %118 : vector<64x1xf32>
    %120 = arith.mulf %113, %113 : vector<64x128xf32>
    %cst_46 = arith.constant dense<0.000000e+00> : vector<64xf32>
    %121 = vector.multi_reduction <add>, %120, %cst_46 [1] : vector<64x128xf32> to vector<64xf32>
    %122 = vector.shape_cast %121 : vector<64xf32> to vector<64x1xf32>
    %cst_47 = arith.constant 3.125000e-02 : f32
    %123 = vector.broadcast %cst_47 : f32 to vector<64x1xf32>
    %124 = arith.mulf %122, %123 : vector<64x1xf32>
    %125 = arith.mulf %119, %119 : vector<64x1xf32>
    %126 = arith.subf %124, %125 : vector<64x1xf32>
    %cst_48 = arith.constant 0.000000e+00 : f32
    %127 = vector.broadcast %cst_48 : f32 to vector<64x1xf32>
    %128 = arith.maximumf %126, %127 : vector<64x1xf32>
    %129 = vector.broadcast %119 : vector<64x1xf32> to vector<64x128xf32>
    %130 = arith.subf %113, %129 : vector<64x128xf32>
    %cst_49 = arith.constant 9.99999974E-6 : f32
    %131 = vector.broadcast %cst_49 : f32 to vector<64x1xf32>
    %132 = arith.addf %128, %131 : vector<64x1xf32>
    %133 = math.rsqrt %132 : vector<64x1xf32>
    %134 = vector.broadcast %133 : vector<64x1xf32> to vector<64x128xf32>
    %135 = arith.mulf %130, %134 : vector<64x128xf32>
    %136 = vector.broadcast %114 : vector<1x128xf32> to vector<64x128xf32>
    %137 = arith.mulf %135, %136 : vector<64x128xf32>
    %138 = vector.broadcast %115 : vector<1x128xf32> to vector<64x128xf32>
    %139 = arith.addf %137, %138 : vector<64x128xf32>
    %140 = arith.truncf %139 : vector<64x128xf32> to vector<64x128xbf16>
    %c0_50 = arith.constant 0 : index
    %c0_51 = arith.constant 0 : index
    %141 = vector.load %arg8[%c0_50, %c0_51] : memref<128x128xbf16, #tpu.memory_space<vmem>>, vector<128x128xbf16>
    %cst_52 = arith.constant dense<0.000000e+00> : vector<64x128xf32>
    %142 = tpu.matmul %140, %141, %cst_52 {dimension_numbers = #tpu.dot_dimension_numbers<[1], [0], [0], [1], [0, 0, 1, 1], [], []>} : vector<64x128xbf16>, vector<128x128xbf16>, vector<64x128xf32> -> vector<64x128xf32>
    %c0_53 = arith.constant 0 : index
    %c0_54 = arith.constant 0 : index
    %143 = vector.load %arg9[%c0_53, %c0_54] : memref<1x128xf32, #tpu.memory_space<vmem>>, vector<1x128xf32>
    %144 = vector.broadcast %143 : vector<1x128xf32> to vector<64x128xf32>
    %145 = arith.addf %142, %144 : vector<64x128xf32>
    %146 = arith.addf %145, %139 : vector<64x128xf32>
    %c0_55 = arith.constant 0 : index
    %c0_56 = arith.constant 0 : index
    %147 = vector.load %arg10[%c0_55, %c0_56] : memref<1x128xf32, #tpu.memory_space<vmem>>, vector<1x128xf32>
    %c0_57 = arith.constant 0 : index
    %c0_58 = arith.constant 0 : index
    %148 = vector.load %arg11[%c0_57, %c0_58] : memref<1x128xf32, #tpu.memory_space<vmem>>, vector<1x128xf32>
    %cst_59 = arith.constant dense<0.000000e+00> : vector<64xf32>
    %149 = vector.multi_reduction <add>, %146, %cst_59 [1] : vector<64x128xf32> to vector<64xf32>
    %150 = vector.shape_cast %149 : vector<64xf32> to vector<64x1xf32>
    %cst_60 = arith.constant 3.125000e-02 : f32
    %151 = vector.broadcast %cst_60 : f32 to vector<64x1xf32>
    %152 = arith.mulf %150, %151 : vector<64x1xf32>
    %153 = arith.mulf %146, %146 : vector<64x128xf32>
    %cst_61 = arith.constant dense<0.000000e+00> : vector<64xf32>
    %154 = vector.multi_reduction <add>, %153, %cst_61 [1] : vector<64x128xf32> to vector<64xf32>
    %155 = vector.shape_cast %154 : vector<64xf32> to vector<64x1xf32>
    %cst_62 = arith.constant 3.125000e-02 : f32
    %156 = vector.broadcast %cst_62 : f32 to vector<64x1xf32>
    %157 = arith.mulf %155, %156 : vector<64x1xf32>
    %158 = arith.mulf %152, %152 : vector<64x1xf32>
    %159 = arith.subf %157, %158 : vector<64x1xf32>
    %cst_63 = arith.constant 0.000000e+00 : f32
    %160 = vector.broadcast %cst_63 : f32 to vector<64x1xf32>
    %161 = arith.maximumf %159, %160 : vector<64x1xf32>
    %162 = vector.broadcast %152 : vector<64x1xf32> to vector<64x128xf32>
    %163 = arith.subf %146, %162 : vector<64x128xf32>
    %cst_64 = arith.constant 9.99999974E-6 : f32
    %164 = vector.broadcast %cst_64 : f32 to vector<64x1xf32>
    %165 = arith.addf %161, %164 : vector<64x1xf32>
    %166 = math.rsqrt %165 : vector<64x1xf32>
    %167 = vector.broadcast %166 : vector<64x1xf32> to vector<64x128xf32>
    %168 = arith.mulf %163, %167 : vector<64x128xf32>
    %169 = vector.broadcast %147 : vector<1x128xf32> to vector<64x128xf32>
    %170 = arith.mulf %168, %169 : vector<64x128xf32>
    %171 = vector.broadcast %148 : vector<1x128xf32> to vector<64x128xf32>
    %172 = arith.addf %170, %171 : vector<64x128xf32>
    %173 = vector.shape_cast %172 : vector<64x128xf32> to vector<4x16x128xf32>
    %c0_65 = arith.constant 0 : index
    %c0_66 = arith.constant 0 : index
    %c0_67 = arith.constant 0 : index
    %174 = vector.load %arg12[%c0_65, %c0_66, %c0_67] : memref<4x16x128xf32, #tpu.memory_space<vmem>>, vector<4x16x128xf32>
    tpu.vector_store %arg12[%c0_65, %c0_66, %c0_67], %173 {strides = array<i32>} : memref<4x16x128xf32, #tpu.memory_space<vmem>>, vector<4x16x128xf32>,
    return
  }
  func.func @transform_0(%arg0: i32) -> (i32, i32, i32) {
    %c0_i32 = arith.constant 0 : i32
    %c0_i32_0 = arith.constant 0 : i32
    %c0_i32_1 = arith.constant 0 : i32
    return %arg0, %c0_i32, %c0_i32_0 : i32, i32, i32
  }
  func.func @transform_1(%arg0: i32) -> (i32, i32) {
    %c0_i32 = arith.constant 0 : i32
    %c0_i32_0 = arith.constant 0 : i32
    %c0_i32_1 = arith.constant 0 : i32
    return %c0_i32, %c0_i32_0 : i32, i32
  }
  func.func @transform_2(%arg0: i32) -> (i32, i32) {
    %c0_i32 = arith.constant 0 : i32
    %c0_i32_0 = arith.constant 0 : i32
    %c0_i32_1 = arith.constant 0 : i32
    return %c0_i32, %c0_i32_0 : i32, i32
  }
  func.func @transform_3(%arg0: i32) -> (i32, i32) {
    %c0_i32 = arith.constant 0 : i32
    %c0_i32_0 = arith.constant 0 : i32
    %c0_i32_1 = arith.constant 0 : i32
    return %c0_i32, %c0_i32_0 : i32, i32
  }
  func.func @transform_4(%arg0: i32) -> (i32, i32) {
    %c0_i32 = arith.constant 0 : i32
    %c0_i32_0 = arith.constant 0 : i32
    %c0_i32_1 = arith.constant 0 : i32
    return %c0_i32, %c0_i32_0 : i32, i32
  }
  func.func @transform_5(%arg0: i32) -> (i32, i32) {
    %c0_i32 = arith.constant 0 : i32
    %c0_i32_0 = arith.constant 0 : i32
    %c0_i32_1 = arith.constant 0 : i32
    return %c0_i32, %c0_i32_0 : i32, i32
  }
  func.func @transform_6(%arg0: i32) -> (i32, i32) {
    %c0_i32 = arith.constant 0 : i32
    %c0_i32_0 = arith.constant 0 : i32
    %c0_i32_1 = arith.constant 0 : i32
    return %c0_i32, %c0_i32_0 : i32, i32
  }
  func.func @transform_7(%arg0: i32) -> (i32, i32) {
    %c0_i32 = arith.constant 0 : i32
    %c0_i32_0 = arith.constant 0 : i32
    %c0_i32_1 = arith.constant 0 : i32
    return %c0_i32, %c0_i32_0 : i32, i32
  }
  func.func @transform_8(%arg0: i32) -> (i32, i32) {
    %c0_i32 = arith.constant 0 : i32
    %c0_i32_0 = arith.constant 0 : i32
    %c0_i32_1 = arith.constant 0 : i32
    return %c0_i32, %c0_i32_0 : i32, i32
  }
  func.func @transform_9(%arg0: i32) -> (i32, i32) {
    %c0_i32 = arith.constant 0 : i32
    %c0_i32_0 = arith.constant 0 : i32
    %c0_i32_1 = arith.constant 0 : i32
    return %c0_i32, %c0_i32_0 : i32, i32
  }
  func.func @transform_10(%arg0: i32) -> (i32, i32) {
    %c0_i32 = arith.constant 0 : i32
    %c0_i32_0 = arith.constant 0 : i32
    %c0_i32_1 = arith.constant 0 : i32
    return %c0_i32, %c0_i32_0 : i32, i32
  }
  func.func @transform_11(%arg0: i32) -> (i32, i32, i32) {
    %c0_i32 = arith.constant 0 : i32
    %c0_i32_0 = arith.constant 0 : i32
    %c0_i32_1 = arith.constant 0 : i32
    return %arg0, %c0_i32, %c0_i32_0 : i32, i32, i32
  }
}

</mosaic_0001>

<llo_original>
// kernel: tpu_custom_call.1
$region0: #{tpu_custom_call.1}
  #allocation0 [shape = 'u32[]', space=smem, size = 0x4, offset = 0x4, fixed_abs, tag = 'smem constant byte address 0x4 - core index']
  #allocation1 [shape = 'u32[72,128]{1,0:T(1,128)}', space=vmem, size = 0x9000, scoped, tag = 'internal scratch']
  #allocation2 [shape = 'bf16[64,128]{1,0:T(8,128)(2,1)}', space=vmem, size = 0x4000, scoped, tag = 'scratch operand']
  %s0 = inlined_call_operand.hbm [shape: bf16[4,16,128], index: 0, kind: input, shape index: {}]
  %s1 = inlined_call_operand.hbm [shape: bf16[128,384], index: 1, kind: input, shape index: {}]
  %s2 = inlined_call_operand.hbm [shape: f32[1,384], index: 2, kind: input, shape index: {}]
  %s3 = inlined_call_operand.hbm [shape: bf16[128,128], index: 3, kind: input, shape index: {}]
  %s4 = inlined_call_operand.vmem [shape: f32[1,128], index: 4, kind: input, shape index: {}]
  %s5 = inlined_call_operand.vmem [shape: f32[1,128], index: 5, kind: input, shape index: {}]
  %s6 = inlined_call_operand.vmem [shape: f32[1,128], index: 6, kind: input, shape index: {}]
  %s7 = inlined_call_operand.hbm [shape: bf16[128,128], index: 7, kind: input, shape index: {}]
  %s8 = inlined_call_operand.vmem [shape: f32[1,128], index: 8, kind: input, shape index: {}]
  %s9 = inlined_call_operand.vmem [shape: f32[1,128], index: 9, kind: input, shape index: {}]
  %s10 = inlined_call_operand.vmem [shape: f32[1,128], index: 10, kind: input, shape index: {}]
  %s11 = inlined_call_operand.hbm [shape: f32[4,16,128], index: 11, kind: output, shape index: {}]
  %s12 = sld [smem:[#allocation0]]
  $region74: #{tpu_custom_call.1} parent=0
    _
  %s14 = ssub.s32 1, %s12
  %s15 = scalar_select 0, %s14, %s12
  $region1: #{tpu_custom_call.1} parent=0
    #allocation3 [shape = 'u8[16384]{0}', space=vmem, size = 0x4000, scoped, tag = 'input window, operand 0, single buffered']
    #allocation4 [shape = 's32[1]{0}', space=sflag, size = 0x4, scoped, tag = 'scoped memory for tpu_custom_call.1']
    #allocation5 [shape = 's32[1]{0}', space=sflag, size = 0x4, scoped, tag = 'scoped memory for tpu_custom_call.1']
    #allocation6 [shape = 'u8[98304]{0}', space=vmem, size = 0x18000, scoped, tag = 'input window, operand 1, single buffered']
    #allocation7 [shape = 's32[1]{0}', space=sflag, size = 0x4, scoped, tag = 'scoped memory for tpu_custom_call.1']
    #allocation8 [shape = 'u8[1536]{0}', space=vmem, size = 0x800, scoped, tag = 'input window, operand 2, single buffered']
    #allocation9 [shape = 'u8[32768]{0}', space=vmem, size = 0x8000, scoped, tag = 'input window, operand 3, single buffered']
    #allocation10 [shape = 's32[1]{0}', space=sflag, size = 0x4, scoped, tag = 'scoped memory for tpu_custom_call.1']
    #allocation11 [shape = 'u8[32768]{0}', space=vmem, size = 0x8000, scoped, tag = 'input window, operand 7, single buffered']
    #allocation12 [shape = 'u8[32768]{0}', space=vmem, size = 0x8000, scoped, tag = 'output window, operand 0, single buffered']
    %16 = vsyncpa [#allocation4], 0
    %17 = vsyncpa [#allocation7], 0
    %18 = vsyncpa [#allocation10], 0
    %19 = vsyncpa [#allocation5], 0
    // Predicated region
    $region2: #{tpu_custom_call.1} parent=1 // pred_check
      _
    $region3: #{tpu_custom_call.1} parent=1 // pred_check_branch
      %21 = sbr.rel (0) target = $region5
    $region4: #{tpu_custom_call.1} parent=1 // pred_region
      %23 = vsyncadd [#allocation4], 0
      %s24 = sshll.u32 %s0, 4
      %s25 = int_to_ptr.hbm [resolvable:$true] %s24
      %s26 = sshll.u32 [#allocation3], 4
      %s27 = int_to_ptr.vmem [resolvable:$true] %s26
      %32 = dma.hbm_to_vmem [thread:$0]  %s25, 512, %s27, [#allocation4], 64, 64, 4
    $region5: #{tpu_custom_call.1} parent=1 // pred_fallthru
      _
    // Predicated region
    $region6: #{tpu_custom_call.1} parent=1 // pred_check
      _
    $region7: #{tpu_custom_call.1} parent=1 // pred_check_branch
      %34 = sbr.rel (0) target = $region9
    $region8: #{tpu_custom_call.1} parent=1 // pred_region
      %36 = vsyncadd [#allocation7], 0
      %s37 = sshll.u32 %s1, 4
      %s38 = int_to_ptr.hbm [resolvable:$true] %s37
      %s39 = sshll.u32 [#allocation6], 4
      %s40 = int_to_ptr.vmem [resolvable:$true] %s39
      %45 = dma.hbm_to_vmem [thread:$0]  %s38, 3072, %s40, [#allocation7], 192, 192, 12
    $region9: #{tpu_custom_call.1} parent=1 // pred_fallthru
      _
    // Predicated region
    $region10: #{tpu_custom_call.1} parent=1 // pred_check
      _
    $region11: #{tpu_custom_call.1} parent=1 // pred_check_branch
      %47 = sbr.rel (0) target = $region13
    $region12: #{tpu_custom_call.1} parent=1 // pred_region
      %49 = vsyncadd [#allocation7], 0
      %s51 = sshll.u32 %s2, 4
      %s52 = int_to_ptr.hbm [resolvable:$true] %s51
      %s53 = sshll.u32 [#allocation8], 4
      %s54 = int_to_ptr.vmem [resolvable:$true] %s53
      %56 = dma.hbm_to_vmem [thread:$0]  %s52, 48, %s54, [#allocation7]
    $region13: #{tpu_custom_call.1} parent=1 // pred_fallthru
      _
    // Predicated region
    $region14: #{tpu_custom_call.1} parent=1 // pred_check
      _
    $region15: #{tpu_custom_call.1} parent=1 // pred_check_branch
      %58 = sbr.rel (0) target = $region17
    $region16: #{tpu_custom_call.1} parent=1 // pred_region
      %60 = vsyncadd [#allocation10], 0
      %s61 = sshll.u32 %s3, 4
      %s62 = int_to_ptr.hbm [resolvable:$true] %s61
      %s63 = sshll.u32 [#allocation9], 4
      %s64 = int_to_ptr.vmem [resolvable:$true] %s63
      %69 = dma.hbm_to_vmem [thread:$0]  %s62, 1024, %s64, [#allocation10], 64, 64, 4
    $region17: #{tpu_custom_call.1} parent=1 // pred_fallthru
      _
    // Predicated region
    $region18: #{tpu_custom_call.1} parent=1 // pred_check
      _
    $region19: #{tpu_custom_call.1} parent=1 // pred_check_branch
      %71 = sbr.rel (0) target = $region21
    $region20: #{tpu_custom_call.1} parent=1 // pred_region
      _
    $region21: #{tpu_custom_call.1} parent=1 // pred_fallthru
      _
    // Predicated region
    $region22: #{tpu_custom_call.1} parent=1 // pred_check
      _
    $region23: #{tpu_custom_call.1} parent=1 // pred_check_branch
      %73 = sbr.rel (0) target = $region25
    $region24: #{tpu_custom_call.1} parent=1 // pred_region
      _
    $region25: #{tpu_custom_call.1} parent=1 // pred_fallthru
      _
    // Predicated region
    $region26: #{tpu_custom_call.1} parent=1 // pred_check
      _
    $region27: #{tpu_custom_call.1} parent=1 // pred_check_branch
      %75 = sbr.rel (0) target = $region29
    $region28: #{tpu_custom_call.1} parent=1 // pred_region
      _
    $region29: #{tpu_custom_call.1} parent=1 // pred_fallthru
      _
    // Predicated region
    $region30: #{tpu_custom_call.1} parent=1 // pred_check
      _
    $region31: #{tpu_custom_call.1} parent=1 // pred_check_branch
      %77 = sbr.rel (0) target = $region33
    $region32: #{tpu_custom_call.1} parent=1 // pred_region
      %79 = vsyncadd [#allocation10], 0
      %s80 = sshll.u32 %s7, 4
      %s81 = int_to_ptr.hbm [resolvable:$true] %s80
      %s82 = sshll.u32 [#allocation11], 4
      %s83 = int_to_ptr.vmem [resolvable:$true] %s82
      %88 = dma.hbm_to_vmem [thread:$0]  %s81, 1024, %s83, [#allocation10], 64, 64, 4
    $region33: #{tpu_custom_call.1} parent=1 // pred_fallthru
      _
    // Predicated region
    $region34: #{tpu_custom_call.1} parent=1 // pred_check
      _
    $region35: #{tpu_custom_call.1} parent=1 // pred_check_branch
      %90 = sbr.rel (0) target = $region37
    $region36: #{tpu_custom_call.1} parent=1 // pred_region
      _
    $region37: #{tpu_custom_call.1} parent=1 // pred_fallthru
      _
    // Predicated region
    $region38: #{tpu_custom_call.1} parent=1 // pred_check
      _
    $region39: #{tpu_custom_call.1} parent=1 // pred_check_branch
      %92 = sbr.rel (0) target = $region41
    $region40: #{tpu_custom_call.1} parent=1 // pred_region
      _
    $region41: #{tpu_custom_call.1} parent=1 // pred_fallthru
      _
    // Predicated region
    $region42: #{tpu_custom_call.1} parent=1 // pred_check
      _
    $region43: #{tpu_custom_call.1} parent=1 // pred_check_branch
      %94 = sbr.rel (0) target = $region45
    $region44: #{tpu_custom_call.1} parent=1 // pred_region
      _
    $region45: #{tpu_custom_call.1} parent=1 // pred_fallthru
      _
    // Predicated region
    $region46: #{tpu_custom_call.1} parent=1 // pred_check
      _
    $region47: #{tpu_custom_call.1} parent=1 // pred_check_branch
      %96 = sbr.rel (0) target = $region49
    $region48: #{tpu_custom_call.1} parent=1 // pred_region
      %98 = dma.done [#allocation4], 512
    $region49: #{tpu_custom_call.1} parent=1 // pred_fallthru
      _
    // Predicated region
    $region50: #{tpu_custom_call.1} parent=1 // pred_check
      _
    $region51: #{tpu_custom_call.1} parent=1 // pred_check_branch
      %100 = sbr.rel (0) target = $region53
    $region52: #{tpu_custom_call.1} parent=1 // pred_region
      %102 = dma.done [#allocation7], 3072
    $region53: #{tpu_custom_call.1} parent=1 // pred_fallthru
      _
    // Predicated region
    $region54: #{tpu_custom_call.1} parent=1 // pred_check
      _
    $region55: #{tpu_custom_call.1} parent=1 // pred_check_branch
      %104 = sbr.rel (0) target = $region57
    $region56: #{tpu_custom_call.1} parent=1 // pred_region
      %106 = dma.done [#allocation7], 48
    $region57: #{tpu_custom_call.1} parent=1 // pred_fallthru
      _
    // Predicated region
    $region58: #{tpu_custom_call.1} parent=1 // pred_check
      _
    $region59: #{tpu_custom_call.1} parent=1 // pred_check_branch
      %108 = sbr.rel (0) target = $region61
    $region60: #{tpu_custom_call.1} parent=1 // pred_region
      %110 = dma.done [#allocation10], 1024
    $region61: #{tpu_custom_call.1} parent=1 // pred_fallthru
      _
    // Predicated region
    $region62: #{tpu_custom_call.1} parent=1 // pred_check
      _
    $region63: #{tpu_custom_call.1} parent=1 // pred_check_branch
      %112 = sbr.rel (0) target = $region65
    $region64: #{tpu_custom_call.1} parent=1 // pred_region
      %114 = dma.done [#allocation10], 1024
    $region65: #{tpu_custom_call.1} parent=1 // pred_fallthru
      _
    %v116 = vld [vmem:[#allocation3] sm:$0xf]
    %v117 = vld [vmem:[#allocation3 + $0x4] sm:$0xf]
    %v118 = vld [vmem:[#allocation3 + $0x8] sm:$0xf]
    %v119 = vld [vmem:[#allocation3 + $0xc] sm:$0xf]
    %v120 = vld [vmem:[#allocation3 + $0x10] sm:$0xf]
    %v121 = vld [vmem:[#allocation3 + $0x14] sm:$0xf]
    %v122 = vld [vmem:[#allocation3 + $0x18] sm:$0xf]
    %v123 = vld [vmem:[#allocation3 + $0x1c] sm:$0xf]
    %v124 = vunpack.c.l.bf16 %v116
    %v125 = vunpack.c.l.bf16 %v117
    %v126 = vunpack.c.l.bf16 %v118
    %v127 = vunpack.c.l.bf16 %v119
    %v128 = vunpack.c.l.bf16 %v120
    %v129 = vunpack.c.l.bf16 %v121
    %v130 = vunpack.c.l.bf16 %v122
    %v131 = vunpack.c.l.bf16 %v123
    %v132 = vld [vmem:[#allocation6] sm:$0xff]
    %v133 = vld [vmem:[#allocation6 + $0x8] sm:$0xf]
    %v134 = vld [vmem:[#allocation6 + $0xc] sm:$0xff]
    %v135 = vld [vmem:[#allocation6 + $0x14] sm:$0xf]
    %v136 = vld [vmem:[#allocation6 + $0x18] sm:$0xff]
    %v137 = vld [vmem:[#allocation6 + $0x20] sm:$0xf]
    %v138 = vld [vmem:[#allocation6 + $0x24] sm:$0xff]
    %v139 = vld [vmem:[#allocation6 + $0x2c] sm:$0xf]
    %v140 = vld [vmem:[#allocation6 + $0x30] sm:$0xff]
    %v141 = vld [vmem:[#allocation6 + $0x38] sm:$0xf]
    %v142 = vld [vmem:[#allocation6 + $0x3c] sm:$0xff]
    %v143 = vld [vmem:[#allocation6 + $0x44] sm:$0xf]
    %v144 = vld [vmem:[#allocation6 + $0x48] sm:$0xff]
    %v145 = vld [vmem:[#allocation6 + $0x50] sm:$0xf]
    %v146 = vld [vmem:[#allocation6 + $0x54] sm:$0xff]
    %v147 = vld [vmem:[#allocation6 + $0x5c] sm:$0xf]
    %v148 = vld [vmem:[#allocation6 + $0x60] sm:$0xff]
    %v149 = vld [vmem:[#allocation6 + $0x68] sm:$0xf]
    %v150 = vld [vmem:[#allocation6 + $0x6c] sm:$0xff]
    %v151 = vld [vmem:[#allocation6 + $0x74] sm:$0xf]
    %v152 = vld [vmem:[#allocation6 + $0x78] sm:$0xff]
    %v153 = vld [vmem:[#allocation6 + $0x80] sm:$0xf]
    %v154 = vld [vmem:[#allocation6 + $0x84] sm:$0xff]
    %v155 = vld [vmem:[#allocation6 + $0x8c] sm:$0xf]
    %v156 = vld [vmem:[#allocation6 + $0x90] sm:$0xff]
    %v157 = vld [vmem:[#allocation6 + $0x98] sm:$0xf]
    %v158 = vld [vmem:[#allocation6 + $0x9c] sm:$0xff]
    %v159 = vld [vmem:[#allocation6 + $0xa4] sm:$0xf]
    %v160 = vld [vmem:[#allocation6 + $0xa8] sm:$0xff]
    %v161 = vld [vmem:[#allocation6 + $0xb0] sm:$0xf]
    %v162 = vld [vmem:[#allocation6 + $0xb4] sm:$0xff]
    %v163 = vld [vmem:[#allocation6 + $0xbc] sm:$0xf]
    %v164 = vld [vmem:[#allocation8] sm:$0x7]
    %v166 = vperm.slane %v164, 0
    %v167 = vperm.slane %v164, 1
    %v168 = vperm.slane %v164, 2
    %v180 = vunpack.c.l.b16 %v116
    %v181 = vunpack.c.l.b16 %v117
    %v182 = vunpack.c.l.b16 %v118
    %v183 = vunpack.c.l.b16 %v119
    %v184 = vunpack.c.l.b16 %v120
    %v185 = vunpack.c.l.b16 %v121
    %v186 = vunpack.c.l.b16 %v122
    %v187 = vunpack.c.l.b16 %v123
    %v188 = vpack.c.b16 %v181, %v180
    %v189 = vpack.c.b16 %v183, %v182
    %v190 = vpack.c.b16 %v185, %v184
    %v191 = vpack.c.b16 %v187, %v186
    %v228 = vunpack.c.l.b16 %v132
    %v229 = vunpack.c.h.b16 %v132
    %v230 = vunpack.c.l.b16 %v133
    %v231 = vunpack.c.l.b16 %v134
    %v232 = vunpack.c.h.b16 %v134
    %v233 = vunpack.c.l.b16 %v135
    %v234 = vunpack.c.l.b16 %v136
    %v235 = vunpack.c.h.b16 %v136
    %v236 = vunpack.c.l.b16 %v137
    %v237 = vunpack.c.l.b16 %v138
    %v238 = vunpack.c.h.b16 %v138
    %v239 = vunpack.c.l.b16 %v139
    %v240 = vunpack.c.l.b16 %v140
    %v241 = vunpack.c.h.b16 %v140
    %v242 = vunpack.c.l.b16 %v141
    %v243 = vunpack.c.l.b16 %v142
    %v244 = vunpack.c.h.b16 %v142
    %v245 = vunpack.c.l.b16 %v143
    %v246 = vunpack.c.l.b16 %v144
    %v247 = vunpack.c.h.b16 %v144
    %v248 = vunpack.c.l.b16 %v145
    %v249 = vunpack.c.l.b16 %v146
    %v250 = vunpack.c.h.b16 %v146
    %v251 = vunpack.c.l.b16 %v147
    %v252 = vunpack.c.l.b16 %v148
    %v253 = vunpack.c.h.b16 %v148
    %v254 = vunpack.c.l.b16 %v149
    %v255 = vunpack.c.l.b16 %v150
    %v256 = vunpack.c.h.b16 %v150
    %v257 = vunpack.c.l.b16 %v151
    %v258 = vunpack.c.l.b16 %v152
    %v259 = vunpack.c.h.b16 %v152
    %v260 = vunpack.c.l.b16 %v153
    %v261 = vunpack.c.l.b16 %v154
    %v262 = vunpack.c.h.b16 %v154
    %v263 = vunpack.c.l.b16 %v155
    %v264 = vunpack.c.l.b16 %v156
    %v265 = vunpack.c.h.b16 %v156
    %v266 = vunpack.c.l.b16 %v157
    %v267 = vunpack.c.l.b16 %v158
    %v268 = vunpack.c.h.b16 %v158
    %v269 = vunpack.c.l.b16 %v159
    %v270 = vunpack.c.l.b16 %v160
    %v271 = vunpack.c.h.b16 %v160
    %v272 = vunpack.c.l.b16 %v161
    %v273 = vunpack.c.l.b16 %v162
    %v274 = vunpack.c.h.b16 %v162
    %v275 = vunpack.c.l.b16 %v163
    %v276 = vpack.c.b16 %v231, %v228
    %v277 = vpack.c.b16 %v232, %v229
    %v278 = vpack.c.b16 %v233, %v230
    %v279 = vpack.c.b16 %v237, %v234
    %v280 = vpack.c.b16 %v238, %v235
    %v281 = vpack.c.b16 %v239, %v236
    %v282 = vpack.c.b16 %v243, %v240
    %v283 = vpack.c.b16 %v244, %v241
    %v284 = vpack.c.b16 %v245, %v242
    %v285 = vpack.c.b16 %v249, %v246
    %v286 = vpack.c.b16 %v250, %v247
    %v287 = vpack.c.b16 %v251, %v248
    %v288 = vpack.c.b16 %v255, %v252
    %v289 = vpack.c.b16 %v256, %v253
    %v290 = vpack.c.b16 %v257, %v254
    %v291 = vpack.c.b16 %v261, %v258
    %v292 = vpack.c.b16 %v262, %v259
    %v293 = vpack.c.b16 %v263, %v260
    %v294 = vpack.c.b16 %v267, %v264
    %v295 = vpack.c.b16 %v268, %v265
    %v296 = vpack.c.b16 %v269, %v266
    %v297 = vpack.c.b16 %v273, %v270
    %v298 = vpack.c.b16 %v274, %v271
    %v299 = vpack.c.b16 %v275, %v272
    %324 = vmatpush.bf16.msra.mxu0 %v297
    %325 = vmatpush.bf16.msra.mxu0 %v294
    %326 = vmatpush.bf16.msra.mxu0 %v291
    %327 = vmatpush.bf16.msra.mxu0 %v288
    %328 = vmatpush.bf16.msra.mxu0 %v285
    %329 = vmatpush.bf16.msra.mxu0 %v282
    %330 = vmatpush.bf16.msra.mxu0 %v279
    %331 = vmatpush.bf16.msra.mxu0 %v276
    %332 = vmatmul.bf16.gmra.mxu0 %v188
    %v333 = vpop.f32.mrf.mxu0
    %v334 = vadd.f32 %v166, %v333
    %v335 = vpop.f32.mrf.mxu0
    %v336 = vadd.f32 %v166, %v335
    %337 = vmatmul.bf16.gmra.mxu0 %v189
    %v338 = vpop.f32.mrf.mxu0
    %v339 = vadd.f32 %v166, %v338
    %v340 = vpop.f32.mrf.mxu0
    %v341 = vadd.f32 %v166, %v340
    %342 = vmatmul.bf16.gmra.mxu0 %v190
    %v343 = vpop.f32.mrf.mxu0
    %v344 = vadd.f32 %v166, %v343
    %v345 = vpop.f32.mrf.mxu0
    %v346 = vadd.f32 %v166, %v345
    %347 = vmatmul.bf16.gmra.mxu0 %v191
    %v348 = vpop.f32.mrf.mxu0
    %v349 = vadd.f32 %v166, %v348
    %v350 = vpop.f32.mrf.mxu0
    %v351 = vadd.f32 %v166, %v350
    %352 = vdwg.mxu0
    %353 = vmatpush.bf16.msra.mxu0 %v298
    %354 = vmatpush.bf16.msra.mxu0 %v295
    %355 = vmatpush.bf16.msra.mxu0 %v292
    %356 = vmatpush.bf16.msra.mxu0 %v289
    %357 = vmatpush.bf16.msra.mxu0 %v286
    %358 = vmatpush.bf16.msra.mxu0 %v283
    %359 = vmatpush.bf16.msra.mxu0 %v280
    %360 = vmatpush.bf16.msra.mxu0 %v277
    %361 = vmatmul.bf16.gmra.mxu0 %v188
    %v362 = vpop.f32.mrf.mxu0
    %v363 = vadd.f32 %v167, %v362
    %v364 = vpop.f32.mrf.mxu0
    %v365 = vadd.f32 %v167, %v364
    %366 = vmatmul.bf16.gmra.mxu0 %v189
    %v367 = vpop.f32.mrf.mxu0
    %v368 = vadd.f32 %v167, %v367
    %v369 = vpop.f32.mrf.mxu0
    %v370 = vadd.f32 %v167, %v369
    %371 = vmatmul.bf16.gmra.mxu0 %v190
    %v372 = vpop.f32.mrf.mxu0
    %v373 = vadd.f32 %v167, %v372
    %v374 = vpop.f32.mrf.mxu0
    %v375 = vadd.f32 %v167, %v374
    %376 = vmatmul.bf16.gmra.mxu0 %v191
    %v377 = vpop.f32.mrf.mxu0
    %v378 = vadd.f32 %v167, %v377
    %v379 = vpop.f32.mrf.mxu0
    %v380 = vadd.f32 %v167, %v379
    %381 = vdwg.mxu0
    %382 = vmatpush.bf16.msra.mxu0 %v299
    %383 = vmatpush.bf16.msra.mxu0 %v296
    %384 = vmatpush.bf16.msra.mxu0 %v293
    %385 = vmatpush.bf16.msra.mxu0 %v290
    %386 = vmatpush.bf16.msra.mxu0 %v287
    %387 = vmatpush.bf16.msra.mxu0 %v284
    %388 = vmatpush.bf16.msra.mxu0 %v281
    %389 = vmatpush.bf16.msra.mxu0 %v278
    %390 = vmatmul.bf16.gmra.mxu0 %v188
    %v391 = vpop.f32.mrf.mxu0
    %v392 = vadd.f32 %v168, %v391
    %v393 = vpop.f32.mrf.mxu0
    %v394 = vadd.f32 %v168, %v393
    %395 = vmatmul.bf16.gmra.mxu0 %v189
    %v396 = vpop.f32.mrf.mxu0
    %v397 = vadd.f32 %v168, %v396
    %v398 = vpop.f32.mrf.mxu0
    %v399 = vadd.f32 %v168, %v398
    %400 = vmatmul.bf16.gmra.mxu0 %v190
    %v401 = vpop.f32.mrf.mxu0
    %v402 = vadd.f32 %v168, %v401
    %v403 = vpop.f32.mrf.mxu0
    %v404 = vadd.f32 %v168, %v403
    %405 = vmatmul.bf16.gmra.mxu0 %v191
    %v406 = vpop.f32.mrf.mxu0
    %v407 = vadd.f32 %v168, %v406
    %v408 = vpop.f32.mrf.mxu0
    %v409 = vadd.f32 %v168, %v408
    %410 = vdwg.mxu0
    %vm411 = vcmask 1043968
    %412 = vst.msk [vmem:[#allocation2] sm:$0xf] %vm411, 0
    %413 = vst.msk [vmem:[#allocation2 + $0x4] sm:$0xf] %vm411, 0
    %414 = vst.msk [vmem:[#allocation2 + $0x8] sm:$0xf] %vm411, 0
    %415 = vst.msk [vmem:[#allocation2 + $0xc] sm:$0xf] %vm411, 0
    %416 = vst.msk [vmem:[#allocation2 + $0x10] sm:$0xf] %vm411, 0
    %417 = vst.msk [vmem:[#allocation2 + $0x14] sm:$0xf] %vm411, 0
    %418 = vst.msk [vmem:[#allocation2 + $0x18] sm:$0xf] %vm411, 0
    %419 = vst.msk [vmem:[#allocation2 + $0x1c] sm:$0xf] %vm411, 0
    %v420 = vpack.c.bf16 %v334, %v334
    %v421 = vpack.c.bf16 %v336, %v336
    %v422 = vpack.c.bf16 %v339, %v339
    %v423 = vpack.c.bf16 %v341, %v341
    %v424 = vpack.c.bf16 %v344, %v344
    %v425 = vpack.c.bf16 %v346, %v346
    %v426 = vpack.c.bf16 %v349, %v349
    %v427 = vpack.c.bf16 %v351, %v351
    %v428 = vpack.c.bf16 %v363, %v363
    %v429 = vpack.c.bf16 %v365, %v365
    %v430 = vpack.c.bf16 %v368, %v368
    %v431 = vpack.c.bf16 %v370, %v370
    %v432 = vpack.c.bf16 %v373, %v373
    %v433 = vpack.c.bf16 %v375, %v375
    %v434 = vpack.c.bf16 %v378, %v378
    %v435 = vpack.c.bf16 %v380, %v380
    %v436 = vpack.c.bf16 %v392, %v392
    %v437 = vpack.c.bf16 %v394, %v394
    %v438 = vpack.c.bf16 %v397, %v397
    %v439 = vpack.c.bf16 %v399, %v399
    %v440 = vpack.c.bf16 %v402, %v402
    %v441 = vpack.c.bf16 %v404, %v404
    %v442 = vpack.c.bf16 %v407, %v407
    %v443 = vpack.c.bf16 %v409, %v409
    %v446 = vunpack.c.l.b16 %v420
    %v447 = vunpack.c.l.b16 %v421
    %v448 = vpack.c.b16 %v447, %v446
    %v451 = vunpack.c.l.b16 %v428
    %v452 = vunpack.c.l.b16 %v429
    %v453 = vpack.c.b16 %v452, %v451
    %vm454 = vcmask 130048
    %v456 = vsel %vm454, %v448, 0
    %v459 = vsel %vm454, %v453, 0
    %461 = vmatpush.bf16.xpose.msra.mxu0 0
    %462 = vmatpush.bf16.xpose.msra.mxu0 0
    %463 = vmatpush.bf16.xpose.msra.mxu0 0
    %464 = vmatpush.bf16.xpose.msra.mxu0 0
    %465 = vmatpush.bf16.xpose.msra.mxu0 0
    %466 = vmatpush.bf16.xpose.msra.mxu0 0
    %467 = vmatpush.bf16.xpose.msra.mxu0 0
    %468 = vmatpush.bf16.xpose.msra.mxu0 %v459
    %469 = vmatmul.bf16.gmra.mxu0 %v456
    %v470 = vpop.f32.mrf.mxu0
    %v471 = vadd.f32 0.0, %v470
    %v472 = vpop.f32.mrf.mxu0
    %v473 = vadd.f32 0.0, %v472
    %474 = vdwg.mxu0
    %v477 = vunpack.c.l.b16 %v422
    %v478 = vunpack.c.l.b16 %v423
    %v479 = vpack.c.b16 %v478, %v477
    %v482 = vunpack.c.l.b16 %v430
    %v483 = vunpack.c.l.b16 %v431
    %v484 = vpack.c.b16 %v483, %v482
    %v486 = vsel %vm454, %v479, 0
    %v489 = vsel %vm454, %v484, 0
    %491 = vmatpush.bf16.xpose.msra.mxu0 0
    %492 = vmatpush.bf16.xpose.msra.mxu0 0
    %493 = vmatpush.bf16.xpose.msra.mxu0 0
    %494 = vmatpush.bf16.xpose.msra.mxu0 0
    %495 = vmatpush.bf16.xpose.msra.mxu0 0
    %496 = vmatpush.bf16.xpose.msra.mxu0 0
    %497 = vmatpush.bf16.xpose.msra.mxu0 0
    %498 = vmatpush.bf16.xpose.msra.mxu0 %v489
    %499 = vmatmul.bf16.gmra.mxu0 %v486
    %v500 = vpop.f32.mrf.mxu0
    %v501 = vadd.f32 0.0, %v500
    %v502 = vpop.f32.mrf.mxu0
    %v503 = vadd.f32 0.0, %v502
    %504 = vdwg.mxu0
    %v507 = vunpack.c.l.b16 %v424
    %v508 = vunpack.c.l.b16 %v425
    %v509 = vpack.c.b16 %v508, %v507
    %v512 = vunpack.c.l.b16 %v432
    %v513 = vunpack.c.l.b16 %v433
    %v514 = vpack.c.b16 %v513, %v512
    %v516 = vsel %vm454, %v509, 0
    %v519 = vsel %vm454, %v514, 0
    %521 = vmatpush.bf16.xpose.msra.mxu0 0
    %522 = vmatpush.bf16.xpose.msra.mxu0 0
    %523 = vmatpush.bf16.xpose.msra.mxu0 0
    %524 = vmatpush.bf16.xpose.msra.mxu0 0
    %525 = vmatpush.bf16.xpose.msra.mxu0 0
    %526 = vmatpush.bf16.xpose.msra.mxu0 0
    %527 = vmatpush.bf16.xpose.msra.mxu0 0
    %528 = vmatpush.bf16.xpose.msra.mxu0 %v519
    %529 = vmatmul.bf16.gmra.mxu0 %v516
    %v530 = vpop.f32.mrf.mxu0
    %v531 = vadd.f32 0.0, %v530
    %v532 = vpop.f32.mrf.mxu0
    %v533 = vadd.f32 0.0, %v532
    %534 = vdwg.mxu0
    %v537 = vunpack.c.l.b16 %v426
    %v538 = vunpack.c.l.b16 %v427
    %v539 = vpack.c.b16 %v538, %v537
    %v542 = vunpack.c.l.b16 %v434
    %v543 = vunpack.c.l.b16 %v435
    %v544 = vpack.c.b16 %v543, %v542
    %v546 = vsel %vm454, %v539, 0
    %v549 = vsel %vm454, %v544, 0
    %551 = vmatpush.bf16.xpose.msra.mxu0 0
    %552 = vmatpush.bf16.xpose.msra.mxu0 0
    %553 = vmatpush.bf16.xpose.msra.mxu0 0
    %554 = vmatpush.bf16.xpose.msra.mxu0 0
    %555 = vmatpush.bf16.xpose.msra.mxu0 0
    %556 = vmatpush.bf16.xpose.msra.mxu0 0
    %557 = vmatpush.bf16.xpose.msra.mxu0 0
    %558 = vmatpush.bf16.xpose.msra.mxu0 %v549
    %559 = vmatmul.bf16.gmra.mxu0 %v546
    %v560 = vpop.f32.mrf.mxu0
    %v561 = vadd.f32 0.0, %v560
    %v562 = vpop.f32.mrf.mxu0
    %v563 = vadd.f32 0.0, %v562
    %564 = vdwg.mxu0
    %v565 = vmul.f32 %v471, 0.25
    %v566 = vmul.f32 %v473, 0.25
    %v567 = vmul.f32 %v501, 0.25
    %v568 = vmul.f32 %v503, 0.25
    %v569 = vmul.f32 %v531, 0.25
    %v570 = vmul.f32 %v533, 0.25
    %v571 = vmul.f32 %v561, 0.25
    %v572 = vmul.f32 %v563, 0.25
    %v573 = vsel %vm454, %v565, -inf
    %574 = vmax.xlane.f32.xlu0 %v573
    %v575 = vpop.xlane.xlu0 %574
    %v576 = vsel %vm454, %v566, -inf
    %577 = vmax.xlane.f32.xlu0 %v576
    %v578 = vpop.xlane.xlu0 %577
    %v579 = vsel %vm454, %v567, -inf
    %580 = vmax.xlane.f32.xlu0 %v579
    %v581 = vpop.xlane.xlu0 %580
    %v582 = vsel %vm454, %v568, -inf
    %583 = vmax.xlane.f32.xlu0 %v582
    %v584 = vpop.xlane.xlu0 %583
    %v585 = vsel %vm454, %v569, -inf
    %586 = vmax.xlane.f32.xlu0 %v585
    %v587 = vpop.xlane.xlu0 %586
    %v588 = vsel %vm454, %v570, -inf
    %589 = vmax.xlane.f32.xlu0 %v588
    %v590 = vpop.xlane.xlu0 %589
    %v591 = vsel %vm454, %v571, -inf
    %592 = vmax.xlane.f32.xlu0 %v591
    %v593 = vpop.xlane.xlu0 %592
    %v594 = vsel %vm454, %v572, -inf
    %595 = vmax.xlane.f32.xlu0 %v594
    %v596 = vpop.xlane.xlu0 %595
    %v597 = vsub.f32 %v565, %v575
    %v598 = vsub.f32 %v566, %v578
    %v599 = vsub.f32 %v567, %v581
    %v600 = vsub.f32 %v568, %v584
    %v601 = vsub.f32 %v569, %v587
    %v602 = vsub.f32 %v570, %v590
    %v603 = vsub.f32 %v571, %v593
    %v604 = vsub.f32 %v572, %v596
    %v605 = vmul.f32 %v597, 1.442695
    %v606 = vpow.pop %v605
    %v607 = vmul.f32 %v598, 1.442695
    %v608 = vpow.pop %v607
    %v609 = vmul.f32 %v599, 1.442695
    %v610 = vpow.pop %v609
    %v611 = vmul.f32 %v600, 1.442695
    %v612 = vpow.pop %v611
    %v613 = vmul.f32 %v601, 1.442695
    %v614 = vpow.pop %v613
    %v615 = vmul.f32 %v602, 1.442695
    %v616 = vpow.pop %v615
    %v617 = vmul.f32 %v603, 1.442695
    %v618 = vpow.pop %v617
    %v619 = vmul.f32 %v604, 1.442695
    %v620 = vpow.pop %v619
    %v621 = vsel %vm454, %v606, 0.0
    %622 = vadd.xlane.f32.xlu0 %v621
    %v623 = vpop.xlane.xlu0 %622
    %v624 = vsel %vm454, %v608, 0.0
    %625 = vadd.xlane.f32.xlu0 %v624
    %v626 = vpop.xlane.xlu0 %625
    %v627 = vsel %vm454, %v610, 0.0
    %628 = vadd.xlane.f32.xlu0 %v627
    %v629 = vpop.xlane.xlu0 %628
    %v630 = vsel %vm454, %v612, 0.0
    %631 = vadd.xlane.f32.xlu0 %v630
    %v632 = vpop.xlane.xlu0 %631
    %v633 = vsel %vm454, %v614, 0.0
    %634 = vadd.xlane.f32.xlu0 %v633
    %v635 = vpop.xlane.xlu0 %634
    %v636 = vsel %vm454, %v616, 0.0
    %637 = vadd.xlane.f32.xlu0 %v636
    %v638 = vpop.xlane.xlu0 %637
    %v639 = vsel %vm454, %v618, 0.0
    %640 = vadd.xlane.f32.xlu0 %v639
    %v641 = vpop.xlane.xlu0 %640
    %v642 = vsel %vm454, %v620, 0.0
    %643 = vadd.xlane.f32.xlu0 %v642
    %v644 = vpop.xlane.xlu0 %643
    %v645 = vrcp.pop %v623
    %v646 = vrcp.pop %v626
    %v647 = vrcp.pop %v629
    %v648 = vrcp.pop %v632
    %v649 = vrcp.pop %v635
    %v650 = vrcp.pop %v638
    %v651 = vrcp.pop %v641
    %v652 = vrcp.pop %v644
    %v653 = vmul.f32 %v606, %v645
    %v654 = vmul.f32 %v608, %v646
    %v655 = vmul.f32 %v610, %v647
    %v656 = vmul.f32 %v612, %v648
    %v657 = vmul.f32 %v614, %v649
    %v658 = vmul.f32 %v616, %v650
    %v659 = vmul.f32 %v618, %v651
    %v660 = vmul.f32 %v620, %v652
    %v661 = vpack.c.bf16 %v653, %v653
    %v662 = vpack.c.bf16 %v654, %v654
    %v663 = vpack.c.bf16 %v655, %v655
    %v664 = vpack.c.bf16 %v656, %v656
    %v665 = vpack.c.bf16 %v657, %v657
    %v666 = vpack.c.bf16 %v658, %v658
    %v667 = vpack.c.bf16 %v659, %v659
    %v668 = vpack.c.bf16 %v660, %v660
    %v671 = vunpack.c.l.b16 %v661
    %v672 = vunpack.c.l.b16 %v662
    %v673 = vpack.c.b16 %v672, %v671
    %v676 = vunpack.c.l.b16 %v436
    %v677 = vunpack.c.l.b16 %v437
    %v678 = vpack.c.b16 %v677, %v676
    %v681 = vsel %vm454, %v673, 0
    %683 = vmatpush.bf16.msra.mxu0 0
    %684 = vmatpush.bf16.msra.mxu0 0
    %685 = vmatpush.bf16.msra.mxu0 0
    %686 = vmatpush.bf16.msra.mxu0 0
    %687 = vmatpush.bf16.msra.mxu0 0
    %688 = vmatpush.bf16.msra.mxu0 0
    %689 = vmatpush.bf16.msra.mxu0 0
    %690 = vmatpush.bf16.msra.mxu0 %v678
    %691 = vmatmul.bf16.gmra.mxu0 %v681
    %v692 = vpop.f32.mrf.mxu0
    %v693 = vadd.f32 0.0, %v692
    %v694 = vpop.f32.mrf.mxu0
    %v695 = vadd.f32 0.0, %v694
    %696 = vdwg.mxu0
    %v699 = vunpack.c.l.b16 %v663
    %v700 = vunpack.c.l.b16 %v664
    %v701 = vpack.c.b16 %v700, %v699
    %v704 = vunpack.c.l.b16 %v438
    %v705 = vunpack.c.l.b16 %v439
    %v706 = vpack.c.b16 %v705, %v704
    %v709 = vsel %vm454, %v701, 0
    %711 = vmatpush.bf16.msra.mxu0 0
    %712 = vmatpush.bf16.msra.mxu0 0
    %713 = vmatpush.bf16.msra.mxu0 0
    %714 = vmatpush.bf16.msra.mxu0 0
    %715 = vmatpush.bf16.msra.mxu0 0
    %716 = vmatpush.bf16.msra.mxu0 0
    %717 = vmatpush.bf16.msra.mxu0 0
    %718 = vmatpush.bf16.msra.mxu0 %v706
    %719 = vmatmul.bf16.gmra.mxu0 %v709
    %v720 = vpop.f32.mrf.mxu0
    %v721 = vadd.f32 0.0, %v720
    %v722 = vpop.f32.mrf.mxu0
    %v723 = vadd.f32 0.0, %v722
    %724 = vdwg.mxu0
    %v727 = vunpack.c.l.b16 %v665
    %v728 = vunpack.c.l.b16 %v666
    %v729 = vpack.c.b16 %v728, %v727
    %v732 = vunpack.c.l.b16 %v440
    %v733 = vunpack.c.l.b16 %v441
    %v734 = vpack.c.b16 %v733, %v732
    %v737 = vsel %vm454, %v729, 0
    %739 = vmatpush.bf16.msra.mxu0 0
    %740 = vmatpush.bf16.msra.mxu0 0
    %741 = vmatpush.bf16.msra.mxu0 0
    %742 = vmatpush.bf16.msra.mxu0 0
    %743 = vmatpush.bf16.msra.mxu0 0
    %744 = vmatpush.bf16.msra.mxu0 0
    %745 = vmatpush.bf16.msra.mxu0 0
    %746 = vmatpush.bf16.msra.mxu0 %v734
    %747 = vmatmul.bf16.gmra.mxu0 %v737
    %v748 = vpop.f32.mrf.mxu0
    %v749 = vadd.f32 0.0, %v748
    %v750 = vpop.f32.mrf.mxu0
    %v751 = vadd.f32 0.0, %v750
    %752 = vdwg.mxu0
    %v755 = vunpack.c.l.b16 %v667
    %v756 = vunpack.c.l.b16 %v668
    %v757 = vpack.c.b16 %v756, %v755
    %v760 = vunpack.c.l.b16 %v442
    %v761 = vunpack.c.l.b16 %v443
    %v762 = vpack.c.b16 %v761, %v760
    %v765 = vsel %vm454, %v757, 0
    %767 = vmatpush.bf16.msra.mxu0 0
    %768 = vmatpush.bf16.msra.mxu0 0
    %769 = vmatpush.bf16.msra.mxu0 0
    %770 = vmatpush.bf16.msra.mxu0 0
    %771 = vmatpush.bf16.msra.mxu0 0
    %772 = vmatpush.bf16.msra.mxu0 0
    %773 = vmatpush.bf16.msra.mxu0 0
    %774 = vmatpush.bf16.msra.mxu0 %v762
    %775 = vmatmul.bf16.gmra.mxu0 %v765
    %v776 = vpop.f32.mrf.mxu0
    %v777 = vadd.f32 0.0, %v776
    %v778 = vpop.f32.mrf.mxu0
    %v779 = vadd.f32 0.0, %v778
    %780 = vdwg.mxu0
    %v781 = vpack.c.bf16 %v693, %v693
    %v782 = vpack.c.bf16 %v695, %v695
    %v783 = vpack.c.bf16 %v721, %v721
    %v784 = vpack.c.bf16 %v723, %v723
    %v785 = vpack.c.bf16 %v749, %v749
    %v786 = vpack.c.bf16 %v751, %v751
    %v787 = vpack.c.bf16 %v777, %v777
    %v788 = vpack.c.bf16 %v779, %v779
    %vm789 = vcmask 125952
    %790 = vst.msk [vmem:[#allocation2] sm:$0xf] %vm789, %v781
    %791 = vst.msk [vmem:[#allocation2 + $0x4] sm:$0xf] %vm789, %v782
    %792 = vst.msk [vmem:[#allocation2 + $0x8] sm:$0xf] %vm789, %v783
    %793 = vst.msk [vmem:[#allocation2 + $0xc] sm:$0xf] %vm789, %v784
    %794 = vst.msk [vmem:[#allocation2 + $0x10] sm:$0xf] %vm789, %v785
    %795 = vst.msk [vmem:[#allocation2 + $0x14] sm:$0xf] %vm789, %v786
    %796 = vst.msk [vmem:[#allocation2 + $0x18] sm:$0xf] %vm789, %v787
    %797 = vst.msk [vmem:[#allocation2 + $0x1c] sm:$0xf] %vm789, %v788
    %798 = vrot.lane.b32.xlu0 %v448, 112
    %v799 = vpop.permute.xlu0 %798
    %800 = vrot.lane.b32.xlu0 %v453, 112
    %v801 = vpop.permute.xlu0 %800
    %v803 = vsel %vm454, %v799, 0
    %v806 = vsel %vm454, %v801, 0
    %808 = vmatpush.bf16.xpose.msra.mxu0 0
    %809 = vmatpush.bf16.xpose.msra.mxu0 0
    %810 = vmatpush.bf16.xpose.msra.mxu0 0
    %811 = vmatpush.bf16.xpose.msra.mxu0 0
    %812 = vmatpush.bf16.xpose.msra.mxu0 0
    %813 = vmatpush.bf16.xpose.msra.mxu0 0
    %814 = vmatpush.bf16.xpose.msra.mxu0 0
    %815 = vmatpush.bf16.xpose.msra.mxu0 %v806
    %816 = vmatmul.bf16.gmra.mxu0 %v803
    %v817 = vpop.f32.mrf.mxu0
    %v818 = vadd.f32 0.0, %v817
    %v819 = vpop.f32.mrf.mxu0
    %v820 = vadd.f32 0.0, %v819
    %821 = vdwg.mxu0
    %822 = vrot.lane.b32.xlu0 %v479, 112
    %v823 = vpop.permute.xlu0 %822
    %824 = vrot.lane.b32.xlu0 %v484, 112
    %v825 = vpop.permute.xlu0 %824
    %v827 = vsel %vm454, %v823, 0
    %v830 = vsel %vm454, %v825, 0
    %832 = vmatpush.bf16.xpose.msra.mxu0 0
    %833 = vmatpush.bf16.xpose.msra.mxu0 0
    %834 = vmatpush.bf16.xpose.msra.mxu0 0
    %835 = vmatpush.bf16.xpose.msra.mxu0 0
    %836 = vmatpush.bf16.xpose.msra.mxu0 0
    %837 = vmatpush.bf16.xpose.msra.mxu0 0
    %838 = vmatpush.bf16.xpose.msra.mxu0 0
    %839 = vmatpush.bf16.xpose.msra.mxu0 %v830
    %840 = vmatmul.bf16.gmra.mxu0 %v827
    %v841 = vpop.f32.mrf.mxu0
    %v842 = vadd.f32 0.0, %v841
    %v843 = vpop.f32.mrf.mxu0
    %v844 = vadd.f32 0.0, %v843
    %845 = vdwg.mxu0
    %846 = vrot.lane.b32.xlu0 %v509, 112
    %v847 = vpop.permute.xlu0 %846
    %848 = vrot.lane.b32.xlu0 %v514, 112
    %v849 = vpop.permute.xlu0 %848
    %v851 = vsel %vm454, %v847, 0
    %v854 = vsel %vm454, %v849, 0
    %856 = vmatpush.bf16.xpose.msra.mxu0 0
    %857 = vmatpush.bf16.xpose.msra.mxu0 0
    %858 = vmatpush.bf16.xpose.msra.mxu0 0
    %859 = vmatpush.bf16.xpose.msra.mxu0 0
    %860 = vmatpush.bf16.xpose.msra.mxu0 0
    %861 = vmatpush.bf16.xpose.msra.mxu0 0
    %862 = vmatpush.bf16.xpose.msra.mxu0 0
    %863 = vmatpush.bf16.xpose.msra.mxu0 %v854
    %864 = vmatmul.bf16.gmra.mxu0 %v851
    %v865 = vpop.f32.mrf.mxu0
    %v866 = vadd.f32 0.0, %v865
    %v867 = vpop.f32.mrf.mxu0
    %v868 = vadd.f32 0.0, %v867
    %869 = vdwg.mxu0
    %870 = vrot.lane.b32.xlu0 %v539, 112
    %v871 = vpop.permute.xlu0 %870
    %872 = vrot.lane.b32.xlu0 %v544, 112
    %v873 = vpop.permute.xlu0 %872
    %v875 = vsel %vm454, %v871, 0
    %v878 = vsel %vm454, %v873, 0
    %880 = vmatpush.bf16.xpose.msra.mxu0 0
    %881 = vmatpush.bf16.xpose.msra.mxu0 0
    %882 = vmatpush.bf16.xpose.msra.mxu0 0
    %883 = vmatpush.bf16.xpose.msra.mxu0 0
    %884 = vmatpush.bf16.xpose.msra.mxu0 0
    %885 = vmatpush.bf16.xpose.msra.mxu0 0
    %886 = vmatpush.bf16.xpose.msra.mxu0 0
    %887 = vmatpush.bf16.xpose.msra.mxu0 %v878
    %888 = vmatmul.bf16.gmra.mxu0 %v875
    %v889 = vpop.f32.mrf.mxu0
    %v890 = vadd.f32 0.0, %v889
    %v891 = vpop.f32.mrf.mxu0
    %v892 = vadd.f32 0.0, %v891
    %893 = vdwg.mxu0
    %v894 = vmul.f32 %v818, 0.25
    %v895 = vmul.f32 %v820, 0.25
    %v896 = vmul.f32 %v842, 0.25
    %v897 = vmul.f32 %v844, 0.25
    %v898 = vmul.f32 %v866, 0.25
    %v899 = vmul.f32 %v868, 0.25
    %v900 = vmul.f32 %v890, 0.25
    %v901 = vmul.f32 %v892, 0.25
    %v902 = vsel %vm454, %v894, -inf
    %903 = vmax.xlane.f32.xlu0 %v902
    %v904 = vpop.xlane.xlu0 %903
    %v905 = vsel %vm454, %v895, -inf
    %906 = vmax.xlane.f32.xlu0 %v905
    %v907 = vpop.xlane.xlu0 %906
    %v908 = vsel %vm454, %v896, -inf
    %909 = vmax.xlane.f32.xlu0 %v908
    %v910 = vpop.xlane.xlu0 %909
    %v911 = vsel %vm454, %v897, -inf
    %912 = vmax.xlane.f32.xlu0 %v911
    %v913 = vpop.xlane.xlu0 %912
    %v914 = vsel %vm454, %v898, -inf
    %915 = vmax.xlane.f32.xlu0 %v914
    %v916 = vpop.xlane.xlu0 %915
    %v917 = vsel %vm454, %v899, -inf
    %918 = vmax.xlane.f32.xlu0 %v917
    %v919 = vpop.xlane.xlu0 %918
    %v920 = vsel %vm454, %v900, -inf
    %921 = vmax.xlane.f32.xlu0 %v920
    %v922 = vpop.xlane.xlu0 %921
    %v923 = vsel %vm454, %v901, -inf
    %924 = vmax.xlane.f32.xlu0 %v923
    %v925 = vpop.xlane.xlu0 %924
    %v926 = vsub.f32 %v894, %v904
    %v927 = vsub.f32 %v895, %v907
    %v928 = vsub.f32 %v896, %v910
    %v929 = vsub.f32 %v897, %v913
    %v930 = vsub.f32 %v898, %v916
    %v931 = vsub.f32 %v899, %v919
    %v932 = vsub.f32 %v900, %v922
    %v933 = vsub.f32 %v901, %v925
    %v934 = vmul.f32 %v926, 1.442695
    %v935 = vpow.pop %v934
    %v936 = vmul.f32 %v927, 1.442695
    %v937 = vpow.pop %v936
    %v938 = vmul.f32 %v928, 1.442695
    %v939 = vpow.pop %v938
    %v940 = vmul.f32 %v929, 1.442695
    %v941 = vpow.pop %v940
    %v942 = vmul.f32 %v930, 1.442695
    %v943 = vpow.pop %v942
    %v944 = vmul.f32 %v931, 1.442695
    %v945 = vpow.pop %v944
    %v946 = vmul.f32 %v932, 1.442695
    %v947 = vpow.pop %v946
    %v948 = vmul.f32 %v933, 1.442695
    %v949 = vpow.pop %v948
    %v950 = vsel %vm454, %v935, 0.0
    %951 = vadd.xlane.f32.xlu0 %v950
    %v952 = vpop.xlane.xlu0 %951
    %v953 = vsel %vm454, %v937, 0.0
    %954 = vadd.xlane.f32.xlu0 %v953
    %v955 = vpop.xlane.xlu0 %954
    %v956 = vsel %vm454, %v939, 0.0
    %957 = vadd.xlane.f32.xlu0 %v956
    %v958 = vpop.xlane.xlu0 %957
    %v959 = vsel %vm454, %v941, 0.0
    %960 = vadd.xlane.f32.xlu0 %v959
    %v961 = vpop.xlane.xlu0 %960
    %v962 = vsel %vm454, %v943, 0.0
    %963 = vadd.xlane.f32.xlu0 %v962
    %v964 = vpop.xlane.xlu0 %963
    %v965 = vsel %vm454, %v945, 0.0
    %966 = vadd.xlane.f32.xlu0 %v965
    %v967 = vpop.xlane.xlu0 %966
    %v968 = vsel %vm454, %v947, 0.0
    %969 = vadd.xlane.f32.xlu0 %v968
    %v970 = vpop.xlane.xlu0 %969
    %v971 = vsel %vm454, %v949, 0.0
    %972 = vadd.xlane.f32.xlu0 %v971
    %v973 = vpop.xlane.xlu0 %972
    %v974 = vrcp.pop %v952
    %v975 = vrcp.pop %v955
    %v976 = vrcp.pop %v958
    %v977 = vrcp.pop %v961
    %v978 = vrcp.pop %v964
    %v979 = vrcp.pop %v967
    %v980 = vrcp.pop %v970
    %v981 = vrcp.pop %v973
    %v982 = vmul.f32 %v935, %v974
    %v983 = vmul.f32 %v937, %v975
    %v984 = vmul.f32 %v939, %v976
    %v985 = vmul.f32 %v941, %v977
    %v986 = vmul.f32 %v943, %v978
    %v987 = vmul.f32 %v945, %v979
    %v988 = vmul.f32 %v947, %v980
    %v989 = vmul.f32 %v949, %v981
    %v990 = vpack.c.bf16 %v982, %v982
    %v991 = vpack.c.bf16 %v983, %v983
    %v992 = vpack.c.bf16 %v984, %v984
    %v993 = vpack.c.bf16 %v985, %v985
    %v994 = vpack.c.bf16 %v986, %v986
    %v995 = vpack.c.bf16 %v987, %v987
    %v996 = vpack.c.bf16 %v988, %v988
    %v997 = vpack.c.bf16 %v989, %v989
    %v1000 = vunpack.c.l.b16 %v990
    %v1001 = vunpack.c.l.b16 %v991
    %v1002 = vpack.c.b16 %v1001, %v1000
    %1003 = vrot.lane.b32.xlu0 %v678, 112
    %v1004 = vpop.permute.xlu0 %1003
    %v1007 = vsel %vm454, %v1002, 0
    %1009 = vmatpush.bf16.msra.mxu0 0
    %1010 = vmatpush.bf16.msra.mxu0 0
    %1011 = vmatpush.bf16.msra.mxu0 0
    %1012 = vmatpush.bf16.msra.mxu0 0
    %1013 = vmatpush.bf16.msra.mxu0 0
    %1014 = vmatpush.bf16.msra.mxu0 0
    %1015 = vmatpush.bf16.msra.mxu0 0
    %1016 = vmatpush.bf16.msra.mxu0 %v1004
    %1017 = vmatmul.bf16.gmra.mxu0 %v1007
    %v1018 = vpop.f32.mrf.mxu0
    %v1019 = vadd.f32 0.0, %v1018
    %v1020 = vpop.f32.mrf.mxu0
    %v1021 = vadd.f32 0.0, %v1020
    %1022 = vdwg.mxu0
    %v1025 = vunpack.c.l.b16 %v992
    %v1026 = vunpack.c.l.b16 %v993
    %v1027 = vpack.c.b16 %v1026, %v1025
    %1028 = vrot.lane.b32.xlu0 %v706, 112
    %v1029 = vpop.permute.xlu0 %1028
    %v1032 = vsel %vm454, %v1027, 0
    %1034 = vmatpush.bf16.msra.mxu0 0
    %1035 = vmatpush.bf16.msra.mxu0 0
    %1036 = vmatpush.bf16.msra.mxu0 0
    %1037 = vmatpush.bf16.msra.mxu0 0
    %1038 = vmatpush.bf16.msra.mxu0 0
    %1039 = vmatpush.bf16.msra.mxu0 0
    %1040 = vmatpush.bf16.msra.mxu0 0
    %1041 = vmatpush.bf16.msra.mxu0 %v1029
    %1042 = vmatmul.bf16.gmra.mxu0 %v1032
    %v1043 = vpop.f32.mrf.mxu0
    %v1044 = vadd.f32 0.0, %v1043
    %v1045 = vpop.f32.mrf.mxu0
    %v1046 = vadd.f32 0.0, %v1045
    %1047 = vdwg.mxu0
    %v1050 = vunpack.c.l.b16 %v994
    %v1051 = vunpack.c.l.b16 %v995
    %v1052 = vpack.c.b16 %v1051, %v1050
    %1053 = vrot.lane.b32.xlu0 %v734, 112
    %v1054 = vpop.permute.xlu0 %1053
    %v1057 = vsel %vm454, %v1052, 0
    %1059 = vmatpush.bf16.msra.mxu0 0
    %1060 = vmatpush.bf16.msra.mxu0 0
    %1061 = vmatpush.bf16.msra.mxu0 0
    %1062 = vmatpush.bf16.msra.mxu0 0
    %1063 = vmatpush.bf16.msra.mxu0 0
    %1064 = vmatpush.bf16.msra.mxu0 0
    %1065 = vmatpush.bf16.msra.mxu0 0
    %1066 = vmatpush.bf16.msra.mxu0 %v1054
    %1067 = vmatmul.bf16.gmra.mxu0 %v1057
    %v1068 = vpop.f32.mrf.mxu0
    %v1069 = vadd.f32 0.0, %v1068
    %v1070 = vpop.f32.mrf.mxu0
    %v1071 = vadd.f32 0.0, %v1070
    %1072 = vdwg.mxu0
    %v1075 = vunpack.c.l.b16 %v996
    %v1076 = vunpack.c.l.b16 %v997
    %v1077 = vpack.c.b16 %v1076, %v1075
    %1078 = vrot.lane.b32.xlu0 %v762, 112
    %v1079 = vpop.permute.xlu0 %1078
    %v1082 = vsel %vm454, %v1077, 0
    %1084 = vmatpush.bf16.msra.mxu0 0
    %1085 = vmatpush.bf16.msra.mxu0 0
    %1086 = vmatpush.bf16.msra.mxu0 0
    %1087 = vmatpush.bf16.msra.mxu0 0
    %1088 = vmatpush.bf16.msra.mxu0 0
    %1089 = vmatpush.bf16.msra.mxu0 0
    %1090 = vmatpush.bf16.msra.mxu0 0
    %1091 = vmatpush.bf16.msra.mxu0 %v1079
    %1092 = vmatmul.bf16.gmra.mxu0 %v1082
    %v1093 = vpop.f32.mrf.mxu0
    %v1094 = vadd.f32 0.0, %v1093
    %v1095 = vpop.f32.mrf.mxu0
    %v1096 = vadd.f32 0.0, %v1095
    %1097 = vdwg.mxu0
    %v1098 = vpack.c.bf16 %v1019, %v1019
    %v1099 = vpack.c.bf16 %v1021, %v1021
    %v1100 = vpack.c.bf16 %v1044, %v1044
    %v1101 = vpack.c.bf16 %v1046, %v1046
    %v1102 = vpack.c.bf16 %v1069, %v1069
    %v1103 = vpack.c.bf16 %v1071, %v1071
    %v1104 = vpack.c.bf16 %v1094, %v1094
    %v1105 = vpack.c.bf16 %v1096, %v1096
    %1114 = vrot.lane.b32.xlu0 %v1098, 16
    %v1115 = vpop.permute.xlu0 %1114
    %1116 = vrot.lane.b32.xlu0 %v1099, 16
    %v1117 = vpop.permute.xlu0 %1116
    %1118 = vrot.lane.b32.xlu0 %v1100, 16
    %v1119 = vpop.permute.xlu0 %1118
    %1120 = vrot.lane.b32.xlu0 %v1101, 16
    %v1121 = vpop.permute.xlu0 %1120
    %1122 = vrot.lane.b32.xlu0 %v1102, 16
    %v1123 = vpop.permute.xlu0 %1122
    %1124 = vrot.lane.b32.xlu0 %v1103, 16
    %v1125 = vpop.permute.xlu0 %1124
    %1126 = vrot.lane.b32.xlu0 %v1104, 16
    %v1127 = vpop.permute.xlu0 %1126
    %1128 = vrot.lane.b32.xlu0 %v1105, 16
    %v1129 = vpop.permute.xlu0 %1128
    %vm1138 = vcmask 257152
    %1139 = vst.msk [vmem:[#allocation2] sm:$0xf] %vm1138, %v1115
    %1140 = vst.msk [vmem:[#allocation2 + $0x4] sm:$0xf] %vm1138, %v1117
    %1141 = vst.msk [vmem:[#allocation2 + $0x8] sm:$0xf] %vm1138, %v1119
    %1142 = vst.msk [vmem:[#allocation2 + $0xc] sm:$0xf] %vm1138, %v1121
    %1143 = vst.msk [vmem:[#allocation2 + $0x10] sm:$0xf] %vm1138, %v1123
    %1144 = vst.msk [vmem:[#allocation2 + $0x14] sm:$0xf] %vm1138, %v1125
    %1145 = vst.msk [vmem:[#allocation2 + $0x18] sm:$0xf] %vm1138, %v1127
    %1146 = vst.msk [vmem:[#allocation2 + $0x1c] sm:$0xf] %vm1138, %v1129
    %1147 = vrot.lane.b32.xlu0 %v448, 96
    %v1148 = vpop.permute.xlu0 %1147
    %1149 = vrot.lane.b32.xlu0 %v453, 96
    %v1150 = vpop.permute.xlu0 %1149
    %v1152 = vsel %vm454, %v1148, 0
    %v1155 = vsel %vm454, %v1150, 0
    %1157 = vmatpush.bf16.xpose.msra.mxu0 0
    %1158 = vmatpush.bf16.xpose.msra.mxu0 0
    %1159 = vmatpush.bf16.xpose.msra.mxu0 0
    %1160 = vmatpush.bf16.xpose.msra.mxu0 0
    %1161 = vmatpush.bf16.xpose.msra.mxu0 0
    %1162 = vmatpush.bf16.xpose.msra.mxu0 0
    %1163 = vmatpush.bf16.xpose.msra.mxu0 0
    %1164 = vmatpush.bf16.xpose.msra.mxu0 %v1155
    %1165 = vmatmul.bf16.gmra.mxu0 %v1152
    %v1166 = vpop.f32.mrf.mxu0
    %v1167 = vadd.f32 0.0, %v1166
    %v1168 = vpop.f32.mrf.mxu0
    %v1169 = vadd.f32 0.0, %v1168
    %1170 = vdwg.mxu0
    %1171 = vrot.lane.b32.xlu0 %v479, 96
    %v1172 = vpop.permute.xlu0 %1171
    %1173 = vrot.lane.b32.xlu0 %v484, 96
    %v1174 = vpop.permute.xlu0 %1173
    %v1176 = vsel %vm454, %v1172, 0
    %v1179 = vsel %vm454, %v1174, 0
    %1181 = vmatpush.bf16.xpose.msra.mxu0 0
    %1182 = vmatpush.bf16.xpose.msra.mxu0 0
    %1183 = vmatpush.bf16.xpose.msra.mxu0 0
    %1184 = vmatpush.bf16.xpose.msra.mxu0 0
    %1185 = vmatpush.bf16.xpose.msra.mxu0 0
    %1186 = vmatpush.bf16.xpose.msra.mxu0 0
    %1187 = vmatpush.bf16.xpose.msra.mxu0 0
    %1188 = vmatpush.bf16.xpose.msra.mxu0 %v1179
    %1189 = vmatmul.bf16.gmra.mxu0 %v1176
    %v1190 = vpop.f32.mrf.mxu0
    %v1191 = vadd.f32 0.0, %v1190
    %v1192 = vpop.f32.mrf.mxu0
    %v1193 = vadd.f32 0.0, %v1192
    %1194 = vdwg.mxu0
    %1195 = vrot.lane.b32.xlu0 %v509, 96
    %v1196 = vpop.permute.xlu0 %1195
    %1197 = vrot.lane.b32.xlu0 %v514, 96
    %v1198 = vpop.permute.xlu0 %1197
    %v1200 = vsel %vm454, %v1196, 0
    %v1203 = vsel %vm454, %v1198, 0
    %1205 = vmatpush.bf16.xpose.msra.mxu0 0
    %1206 = vmatpush.bf16.xpose.msra.mxu0 0
    %1207 = vmatpush.bf16.xpose.msra.mxu0 0
    %1208 = vmatpush.bf16.xpose.msra.mxu0 0
    %1209 = vmatpush.bf16.xpose.msra.mxu0 0
    %1210 = vmatpush.bf16.xpose.msra.mxu0 0
    %1211 = vmatpush.bf16.xpose.msra.mxu0 0
    %1212 = vmatpush.bf16.xpose.msra.mxu0 %v1203
    %1213 = vmatmul.bf16.gmra.mxu0 %v1200
    %v1214 = vpop.f32.mrf.mxu0
    %v1215 = vadd.f32 0.0, %v1214
    %v1216 = vpop.f32.mrf.mxu0
    %v1217 = vadd.f32 0.0, %v1216
    %1218 = vdwg.mxu0
    %1219 = vrot.lane.b32.xlu0 %v539, 96
    %v1220 = vpop.permute.xlu0 %1219
    %1221 = vrot.lane.b32.xlu0 %v544, 96
    %v1222 = vpop.permute.xlu0 %1221
    %v1224 = vsel %vm454, %v1220, 0
    %v1227 = vsel %vm454, %v1222, 0
    %1229 = vmatpush.bf16.xpose.msra.mxu0 0
    %1230 = vmatpush.bf16.xpose.msra.mxu0 0
    %1231 = vmatpush.bf16.xpose.msra.mxu0 0
    %1232 = vmatpush.bf16.xpose.msra.mxu0 0
    %1233 = vmatpush.bf16.xpose.msra.mxu0 0
    %1234 = vmatpush.bf16.xpose.msra.mxu0 0
    %1235 = vmatpush.bf16.xpose.msra.mxu0 0
    %1236 = vmatpush.bf16.xpose.msra.mxu0 %v1227
    %1237 = vmatmul.bf16.gmra.mxu0 %v1224
    %v1238 = vpop.f32.mrf.mxu0
    %v1239 = vadd.f32 0.0, %v1238
    %v1240 = vpop.f32.mrf.mxu0
    %v1241 = vadd.f32 0.0, %v1240
    %1242 = vdwg.mxu0
    %v1243 = vmul.f32 %v1167, 0.25
    %v1244 = vmul.f32 %v1169, 0.25
    %v1245 = vmul.f32 %v1191, 0.25
    %v1246 = vmul.f32 %v1193, 0.25
    %v1247 = vmul.f32 %v1215, 0.25
    %v1248 = vmul.f32 %v1217, 0.25
    %v1249 = vmul.f32 %v1239, 0.25
    %v1250 = vmul.f32 %v1241, 0.25
    %v1251 = vsel %vm454, %v1243, -inf
    %1252 = vmax.xlane.f32.xlu0 %v1251
    %v1253 = vpop.xlane.xlu0 %1252
    %v1254 = vsel %vm454, %v1244, -inf
    %1255 = vmax.xlane.f32.xlu0 %v1254
    %v1256 = vpop.xlane.xlu0 %1255
    %v1257 = vsel %vm454, %v1245, -inf
    %1258 = vmax.xlane.f32.xlu0 %v1257
    %v1259 = vpop.xlane.xlu0 %1258
    %v1260 = vsel %vm454, %v1246, -inf
    %1261 = vmax.xlane.f32.xlu0 %v1260
    %v1262 = vpop.xlane.xlu0 %1261
    %v1263 = vsel %vm454, %v1247, -inf
    %1264 = vmax.xlane.f32.xlu0 %v1263
    %v1265 = vpop.xlane.xlu0 %1264
    %v1266 = vsel %vm454, %v1248, -inf
    %1267 = vmax.xlane.f32.xlu0 %v1266
    %v1268 = vpop.xlane.xlu0 %1267
    %v1269 = vsel %vm454, %v1249, -inf
    %1270 = vmax.xlane.f32.xlu0 %v1269
    %v1271 = vpop.xlane.xlu0 %1270
    %v1272 = vsel %vm454, %v1250, -inf
    %1273 = vmax.xlane.f32.xlu0 %v1272
    %v1274 = vpop.xlane.xlu0 %1273
    %v1275 = vsub.f32 %v1243, %v1253
    %v1276 = vsub.f32 %v1244, %v1256
    %v1277 = vsub.f32 %v1245, %v1259
    %v1278 = vsub.f32 %v1246, %v1262
    %v1279 = vsub.f32 %v1247, %v1265
    %v1280 = vsub.f32 %v1248, %v1268
    %v1281 = vsub.f32 %v1249, %v1271
    %v1282 = vsub.f32 %v1250, %v1274
    %v1283 = vmul.f32 %v1275, 1.442695
    %v1284 = vpow.pop %v1283
    %v1285 = vmul.f32 %v1276, 1.442695
    %v1286 = vpow.pop %v1285
    %v1287 = vmul.f32 %v1277, 1.442695
    %v1288 = vpow.pop %v1287
    %v1289 = vmul.f32 %v1278, 1.442695
    %v1290 = vpow.pop %v1289
    %v1291 = vmul.f32 %v1279, 1.442695
    %v1292 = vpow.pop %v1291
    %v1293 = vmul.f32 %v1280, 1.442695
    %v1294 = vpow.pop %v1293
    %v1295 = vmul.f32 %v1281, 1.442695
    %v1296 = vpow.pop %v1295
    %v1297 = vmul.f32 %v1282, 1.442695
    %v1298 = vpow.pop %v1297
    %v1299 = vsel %vm454, %v1284, 0.0
    %1300 = vadd.xlane.f32.xlu0 %v1299
    %v1301 = vpop.xlane.xlu0 %1300
    %v1302 = vsel %vm454, %v1286, 0.0
    %1303 = vadd.xlane.f32.xlu0 %v1302
    %v1304 = vpop.xlane.xlu0 %1303
    %v1305 = vsel %vm454, %v1288, 0.0
    %1306 = vadd.xlane.f32.xlu0 %v1305
    %v1307 = vpop.xlane.xlu0 %1306
    %v1308 = vsel %vm454, %v1290, 0.0
    %1309 = vadd.xlane.f32.xlu0 %v1308
    %v1310 = vpop.xlane.xlu0 %1309
    %v1311 = vsel %vm454, %v1292, 0.0
    %1312 = vadd.xlane.f32.xlu0 %v1311
    %v1313 = vpop.xlane.xlu0 %1312
    %v1314 = vsel %vm454, %v1294, 0.0
    %1315 = vadd.xlane.f32.xlu0 %v1314
    %v1316 = vpop.xlane.xlu0 %1315
    %v1317 = vsel %vm454, %v1296, 0.0
    %1318 = vadd.xlane.f32.xlu0 %v1317
    %v1319 = vpop.xlane.xlu0 %1318
    %v1320 = vsel %vm454, %v1298, 0.0
    %1321 = vadd.xlane.f32.xlu0 %v1320
    %v1322 = vpop.xlane.xlu0 %1321
    %v1323 = vrcp.pop %v1301
    %v1324 = vrcp.pop %v1304
    %v1325 = vrcp.pop %v1307
    %v1326 = vrcp.pop %v1310
    %v1327 = vrcp.pop %v1313
    %v1328 = vrcp.pop %v1316
    %v1329 = vrcp.pop %v1319
    %v1330 = vrcp.pop %v1322
    %v1331 = vmul.f32 %v1284, %v1323
    %v1332 = vmul.f32 %v1286, %v1324
    %v1333 = vmul.f32 %v1288, %v1325
    %v1334 = vmul.f32 %v1290, %v1326
    %v1335 = vmul.f32 %v1292, %v1327
    %v1336 = vmul.f32 %v1294, %v1328
    %v1337 = vmul.f32 %v1296, %v1329
    %v1338 = vmul.f32 %v1298, %v1330
    %v1339 = vpack.c.bf16 %v1331, %v1331
    %v1340 = vpack.c.bf16 %v1332, %v1332
    %v1341 = vpack.c.bf16 %v1333, %v1333
    %v1342 = vpack.c.bf16 %v1334, %v1334
    %v1343 = vpack.c.bf16 %v1335, %v1335
    %v1344 = vpack.c.bf16 %v1336, %v1336
    %v1345 = vpack.c.bf16 %v1337, %v1337
    %v1346 = vpack.c.bf16 %v1338, %v1338
    %v1349 = vunpack.c.l.b16 %v1339
    %v1350 = vunpack.c.l.b16 %v1340
    %v1351 = vpack.c.b16 %v1350, %v1349
    %1352 = vrot.lane.b32.xlu0 %v678, 96
    %v1353 = vpop.permute.xlu0 %1352
    %v1356 = vsel %vm454, %v1351, 0
    %1358 = vmatpush.bf16.msra.mxu0 0
    %1359 = vmatpush.bf16.msra.mxu0 0
    %1360 = vmatpush.bf16.msra.mxu0 0
    %1361 = vmatpush.bf16.msra.mxu0 0
    %1362 = vmatpush.bf16.msra.mxu0 0
    %1363 = vmatpush.bf16.msra.mxu0 0
    %1364 = vmatpush.bf16.msra.mxu0 0
    %1365 = vmatpush.bf16.msra.mxu0 %v1353
    %1366 = vmatmul.bf16.gmra.mxu0 %v1356
    %v1367 = vpop.f32.mrf.mxu0
    %v1368 = vadd.f32 0.0, %v1367
    %v1369 = vpop.f32.mrf.mxu0
    %v1370 = vadd.f32 0.0, %v1369
    %1371 = vdwg.mxu0
    %v1374 = vunpack.c.l.b16 %v1341
    %v1375 = vunpack.c.l.b16 %v1342
    %v1376 = vpack.c.b16 %v1375, %v1374
    %1377 = vrot.lane.b32.xlu0 %v706, 96
    %v1378 = vpop.permute.xlu0 %1377
    %v1381 = vsel %vm454, %v1376, 0
    %1383 = vmatpush.bf16.msra.mxu0 0
    %1384 = vmatpush.bf16.msra.mxu0 0
    %1385 = vmatpush.bf16.msra.mxu0 0
    %1386 = vmatpush.bf16.msra.mxu0 0
    %1387 = vmatpush.bf16.msra.mxu0 0
    %1388 = vmatpush.bf16.msra.mxu0 0
    %1389 = vmatpush.bf16.msra.mxu0 0
    %1390 = vmatpush.bf16.msra.mxu0 %v1378
    %1391 = vmatmul.bf16.gmra.mxu0 %v1381
    %v1392 = vpop.f32.mrf.mxu0
    %v1393 = vadd.f32 0.0, %v1392
    %v1394 = vpop.f32.mrf.mxu0
    %v1395 = vadd.f32 0.0, %v1394
    %1396 = vdwg.mxu0
    %v1399 = vunpack.c.l.b16 %v1343
    %v1400 = vunpack.c.l.b16 %v1344
    %v1401 = vpack.c.b16 %v1400, %v1399
    %1402 = vrot.lane.b32.xlu0 %v734, 96
    %v1403 = vpop.permute.xlu0 %1402
    %v1406 = vsel %vm454, %v1401, 0
    %1408 = vmatpush.bf16.msra.mxu0 0
    %1409 = vmatpush.bf16.msra.mxu0 0
    %1410 = vmatpush.bf16.msra.mxu0 0
    %1411 = vmatpush.bf16.msra.mxu0 0
    %1412 = vmatpush.bf16.msra.mxu0 0
    %1413 = vmatpush.bf16.msra.mxu0 0
    %1414 = vmatpush.bf16.msra.mxu0 0
    %1415 = vmatpush.bf16.msra.mxu0 %v1403
    %1416 = vmatmul.bf16.gmra.mxu0 %v1406
    %v1417 = vpop.f32.mrf.mxu0
    %v1418 = vadd.f32 0.0, %v1417
    %v1419 = vpop.f32.mrf.mxu0
    %v1420 = vadd.f32 0.0, %v1419
    %1421 = vdwg.mxu0
    %v1424 = vunpack.c.l.b16 %v1345
    %v1425 = vunpack.c.l.b16 %v1346
    %v1426 = vpack.c.b16 %v1425, %v1424
    %1427 = vrot.lane.b32.xlu0 %v762, 96
    %v1428 = vpop.permute.xlu0 %1427
    %v1431 = vsel %vm454, %v1426, 0
    %1433 = vmatpush.bf16.msra.mxu0 0
    %1434 = vmatpush.bf16.msra.mxu0 0
    %1435 = vmatpush.bf16.msra.mxu0 0
    %1436 = vmatpush.bf16.msra.mxu0 0
    %1437 = vmatpush.bf16.msra.mxu0 0
    %1438 = vmatpush.bf16.msra.mxu0 0
    %1439 = vmatpush.bf16.msra.mxu0 0
    %1440 = vmatpush.bf16.msra.mxu0 %v1428
    %1441 = vmatmul.bf16.gmra.mxu0 %v1431
    %v1442 = vpop.f32.mrf.mxu0
    %v1443 = vadd.f32 0.0, %v1442
    %v1444 = vpop.f32.mrf.mxu0
    %v1445 = vadd.f32 0.0, %v1444
    %1446 = vdwg.mxu0
    %v1447 = vpack.c.bf16 %v1368, %v1368
    %v1448 = vpack.c.bf16 %v1370, %v1370
    %v1449 = vpack.c.bf16 %v1393, %v1393
    %v1450 = vpack.c.bf16 %v1395, %v1395
    %v1451 = vpack.c.bf16 %v1418, %v1418
    %v1452 = vpack.c.bf16 %v1420, %v1420
    %v1453 = vpack.c.bf16 %v1443, %v1443
    %v1454 = vpack.c.bf16 %v1445, %v1445
    %1463 = vrot.lane.b32.xlu0 %v1447, 32
    %v1464 = vpop.permute.xlu0 %1463
    %1465 = vrot.lane.b32.xlu0 %v1448, 32
    %v1466 = vpop.permute.xlu0 %1465
    %1467 = vrot.lane.b32.xlu0 %v1449, 32
    %v1468 = vpop.permute.xlu0 %1467
    %1469 = vrot.lane.b32.xlu0 %v1450, 32
    %v1470 = vpop.permute.xlu0 %1469
    %1471 = vrot.lane.b32.xlu0 %v1451, 32
    %v1472 = vpop.permute.xlu0 %1471
    %1473 = vrot.lane.b32.xlu0 %v1452, 32
    %v1474 = vpop.permute.xlu0 %1473
    %1475 = vrot.lane.b32.xlu0 %v1453, 32
    %v1476 = vpop.permute.xlu0 %1475
    %1477 = vrot.lane.b32.xlu0 %v1454, 32
    %v1478 = vpop.permute.xlu0 %1477
    %vm1487 = vcmask 388352
    %1488 = vst.msk [vmem:[#allocation2] sm:$0xf] %vm1487, %v1464
    %1489 = vst.msk [vmem:[#allocation2 + $0x4] sm:$0xf] %vm1487, %v1466
    %1490 = vst.msk [vmem:[#allocation2 + $0x8] sm:$0xf] %vm1487, %v1468
    %1491 = vst.msk [vmem:[#allocation2 + $0xc] sm:$0xf] %vm1487, %v1470
    %1492 = vst.msk [vmem:[#allocation2 + $0x10] sm:$0xf] %vm1487, %v1472
    %1493 = vst.msk [vmem:[#allocation2 + $0x14] sm:$0xf] %vm1487, %v1474
    %1494 = vst.msk [vmem:[#allocation2 + $0x18] sm:$0xf] %vm1487, %v1476
    %1495 = vst.msk [vmem:[#allocation2 + $0x1c] sm:$0xf] %vm1487, %v1478
    %1496 = vrot.lane.b32.xlu0 %v448, 80
    %v1497 = vpop.permute.xlu0 %1496
    %1498 = vrot.lane.b32.xlu0 %v453, 80
    %v1499 = vpop.permute.xlu0 %1498
    %v1501 = vsel %vm454, %v1497, 0
    %v1504 = vsel %vm454, %v1499, 0
    %1506 = vmatpush.bf16.xpose.msra.mxu0 0
    %1507 = vmatpush.bf16.xpose.msra.mxu0 0
    %1508 = vmatpush.bf16.xpose.msra.mxu0 0
    %1509 = vmatpush.bf16.xpose.msra.mxu0 0
    %1510 = vmatpush.bf16.xpose.msra.mxu0 0
    %1511 = vmatpush.bf16.xpose.msra.mxu0 0
    %1512 = vmatpush.bf16.xpose.msra.mxu0 0
    %1513 = vmatpush.bf16.xpose.msra.mxu0 %v1504
    %1514 = vmatmul.bf16.gmra.mxu0 %v1501
    %v1515 = vpop.f32.mrf.mxu0
    %v1516 = vadd.f32 0.0, %v1515
    %v1517 = vpop.f32.mrf.mxu0
    %v1518 = vadd.f32 0.0, %v1517
    %1519 = vdwg.mxu0
    %1520 = vrot.lane.b32.xlu0 %v479, 80
    %v1521 = vpop.permute.xlu0 %1520
    %1522 = vrot.lane.b32.xlu0 %v484, 80
    %v1523 = vpop.permute.xlu0 %1522
    %v1525 = vsel %vm454, %v1521, 0
    %v1528 = vsel %vm454, %v1523, 0
    %1530 = vmatpush.bf16.xpose.msra.mxu0 0
    %1531 = vmatpush.bf16.xpose.msra.mxu0 0
    %1532 = vmatpush.bf16.xpose.msra.mxu0 0
    %1533 = vmatpush.bf16.xpose.msra.mxu0 0
    %1534 = vmatpush.bf16.xpose.msra.mxu0 0
    %1535 = vmatpush.bf16.xpose.msra.mxu0 0
    %1536 = vmatpush.bf16.xpose.msra.mxu0 0
    %1537 = vmatpush.bf16.xpose.msra.mxu0 %v1528
    %1538 = vmatmul.bf16.gmra.mxu0 %v1525
    %v1539 = vpop.f32.mrf.mxu0
    %v1540 = vadd.f32 0.0, %v1539
    %v1541 = vpop.f32.mrf.mxu0
    %v1542 = vadd.f32 0.0, %v1541
    %1543 = vdwg.mxu0
    %1544 = vrot.lane.b32.xlu0 %v509, 80
    %v1545 = vpop.permute.xlu0 %1544
    %1546 = vrot.lane.b32.xlu0 %v514, 80
    %v1547 = vpop.permute.xlu0 %1546
    %v1549 = vsel %vm454, %v1545, 0
    %v1552 = vsel %vm454, %v1547, 0
    %1554 = vmatpush.bf16.xpose.msra.mxu0 0
    %1555 = vmatpush.bf16.xpose.msra.mxu0 0
    %1556 = vmatpush.bf16.xpose.msra.mxu0 0
    %1557 = vmatpush.bf16.xpose.msra.mxu0 0
    %1558 = vmatpush.bf16.xpose.msra.mxu0 0
    %1559 = vmatpush.bf16.xpose.msra.mxu0 0
    %1560 = vmatpush.bf16.xpose.msra.mxu0 0
    %1561 = vmatpush.bf16.xpose.msra.mxu0 %v1552
    %1562 = vmatmul.bf16.gmra.mxu0 %v1549
    %v1563 = vpop.f32.mrf.mxu0
    %v1564 = vadd.f32 0.0, %v1563
    %v1565 = vpop.f32.mrf.mxu0
    %v1566 = vadd.f32 0.0, %v1565
    %1567 = vdwg.mxu0
    %1568 = vrot.lane.b32.xlu0 %v539, 80
    %v1569 = vpop.permute.xlu0 %1568
    %1570 = vrot.lane.b32.xlu0 %v544, 80
    %v1571 = vpop.permute.xlu0 %1570
    %v1573 = vsel %vm454, %v1569, 0
    %v1576 = vsel %vm454, %v1571, 0
    %1578 = vmatpush.bf16.xpose.msra.mxu0 0
    %1579 = vmatpush.bf16.xpose.msra.mxu0 0
    %1580 = vmatpush.bf16.xpose.msra.mxu0 0
    %1581 = vmatpush.bf16.xpose.msra.mxu0 0
    %1582 = vmatpush.bf16.xpose.msra.mxu0 0
    %1583 = vmatpush.bf16.xpose.msra.mxu0 0
    %1584 = vmatpush.bf16.xpose.msra.mxu0 0
    %1585 = vmatpush.bf16.xpose.msra.mxu0 %v1576
    %1586 = vmatmul.bf16.gmra.mxu0 %v1573
    %v1587 = vpop.f32.mrf.mxu0
    %v1588 = vadd.f32 0.0, %v1587
    %v1589 = vpop.f32.mrf.mxu0
    %v1590 = vadd.f32 0.0, %v1589
    %1591 = vdwg.mxu0
    %v1592 = vmul.f32 %v1516, 0.25
    %v1593 = vmul.f32 %v1518, 0.25
    %v1594 = vmul.f32 %v1540, 0.25
    %v1595 = vmul.f32 %v1542, 0.25
    %v1596 = vmul.f32 %v1564, 0.25
    %v1597 = vmul.f32 %v1566, 0.25
    %v1598 = vmul.f32 %v1588, 0.25
    %v1599 = vmul.f32 %v1590, 0.25
    %v1600 = vsel %vm454, %v1592, -inf
    %1601 = vmax.xlane.f32.xlu0 %v1600
    %v1602 = vpop.xlane.xlu0 %1601
    %v1603 = vsel %vm454, %v1593, -inf
    %1604 = vmax.xlane.f32.xlu0 %v1603
    %v1605 = vpop.xlane.xlu0 %1604
    %v1606 = vsel %vm454, %v1594, -inf
    %1607 = vmax.xlane.f32.xlu0 %v1606
    %v1608 = vpop.xlane.xlu0 %1607
    %v1609 = vsel %vm454, %v1595, -inf
    %1610 = vmax.xlane.f32.xlu0 %v1609
    %v1611 = vpop.xlane.xlu0 %1610
    %v1612 = vsel %vm454, %v1596, -inf
    %1613 = vmax.xlane.f32.xlu0 %v1612
    %v1614 = vpop.xlane.xlu0 %1613
    %v1615 = vsel %vm454, %v1597, -inf
    %1616 = vmax.xlane.f32.xlu0 %v1615
    %v1617 = vpop.xlane.xlu0 %1616
    %v1618 = vsel %vm454, %v1598, -inf
    %1619 = vmax.xlane.f32.xlu0 %v1618
    %v1620 = vpop.xlane.xlu0 %1619
    %v1621 = vsel %vm454, %v1599, -inf
    %1622 = vmax.xlane.f32.xlu0 %v1621
    %v1623 = vpop.xlane.xlu0 %1622
    %v1624 = vsub.f32 %v1592, %v1602
    %v1625 = vsub.f32 %v1593, %v1605
    %v1626 = vsub.f32 %v1594, %v1608
    %v1627 = vsub.f32 %v1595, %v1611
    %v1628 = vsub.f32 %v1596, %v1614
    %v1629 = vsub.f32 %v1597, %v1617
    %v1630 = vsub.f32 %v1598, %v1620
    %v1631 = vsub.f32 %v1599, %v1623
    %v1632 = vmul.f32 %v1624, 1.442695
    %v1633 = vpow.pop %v1632
    %v1634 = vmul.f32 %v1625, 1.442695
    %v1635 = vpow.pop %v1634
    %v1636 = vmul.f32 %v1626, 1.442695
    %v1637 = vpow.pop %v1636
    %v1638 = vmul.f32 %v1627, 1.442695
    %v1639 = vpow.pop %v1638
    %v1640 = vmul.f32 %v1628, 1.442695
    %v1641 = vpow.pop %v1640
    %v1642 = vmul.f32 %v1629, 1.442695
    %v1643 = vpow.pop %v1642
    %v1644 = vmul.f32 %v1630, 1.442695
    %v1645 = vpow.pop %v1644
    %v1646 = vmul.f32 %v1631, 1.442695
    %v1647 = vpow.pop %v1646
    %v1648 = vsel %vm454, %v1633, 0.0
    %1649 = vadd.xlane.f32.xlu0 %v1648
    %v1650 = vpop.xlane.xlu0 %1649
    %v1651 = vsel %vm454, %v1635, 0.0
    %1652 = vadd.xlane.f32.xlu0 %v1651
    %v1653 = vpop.xlane.xlu0 %1652
    %v1654 = vsel %vm454, %v1637, 0.0
    %1655 = vadd.xlane.f32.xlu0 %v1654
    %v1656 = vpop.xlane.xlu0 %1655
    %v1657 = vsel %vm454, %v1639, 0.0
    %1658 = vadd.xlane.f32.xlu0 %v1657
    %v1659 = vpop.xlane.xlu0 %1658
    %v1660 = vsel %vm454, %v1641, 0.0
    %1661 = vadd.xlane.f32.xlu0 %v1660
    %v1662 = vpop.xlane.xlu0 %1661
    %v1663 = vsel %vm454, %v1643, 0.0
    %1664 = vadd.xlane.f32.xlu0 %v1663
    %v1665 = vpop.xlane.xlu0 %1664
    %v1666 = vsel %vm454, %v1645, 0.0
    %1667 = vadd.xlane.f32.xlu0 %v1666
    %v1668 = vpop.xlane.xlu0 %1667
    %v1669 = vsel %vm454, %v1647, 0.0
    %1670 = vadd.xlane.f32.xlu0 %v1669
    %v1671 = vpop.xlane.xlu0 %1670
    %v1672 = vrcp.pop %v1650
    %v1673 = vrcp.pop %v1653
    %v1674 = vrcp.pop %v1656
    %v1675 = vrcp.pop %v1659
    %v1676 = vrcp.pop %v1662
    %v1677 = vrcp.pop %v1665
    %v1678 = vrcp.pop %v1668
    %v1679 = vrcp.pop %v1671
    %v1680 = vmul.f32 %v1633, %v1672
    %v1681 = vmul.f32 %v1635, %v1673
    %v1682 = vmul.f32 %v1637, %v1674
    %v1683 = vmul.f32 %v1639, %v1675
    %v1684 = vmul.f32 %v1641, %v1676
    %v1685 = vmul.f32 %v1643, %v1677
    %v1686 = vmul.f32 %v1645, %v1678
    %v1687 = vmul.f32 %v1647, %v1679
    %v1688 = vpack.c.bf16 %v1680, %v1680
    %v1689 = vpack.c.bf16 %v1681, %v1681
    %v1690 = vpack.c.bf16 %v1682, %v1682
    %v1691 = vpack.c.bf16 %v1683, %v1683
    %v1692 = vpack.c.bf16 %v1684, %v1684
    %v1693 = vpack.c.bf16 %v1685, %v1685
    %v1694 = vpack.c.bf16 %v1686, %v1686
    %v1695 = vpack.c.bf16 %v1687, %v1687
    %v1698 = vunpack.c.l.b16 %v1688
    %v1699 = vunpack.c.l.b16 %v1689
    %v1700 = vpack.c.b16 %v1699, %v1698
    %1701 = vrot.lane.b32.xlu0 %v678, 80
    %v1702 = vpop.permute.xlu0 %1701
    %v1705 = vsel %vm454, %v1700, 0
    %1707 = vmatpush.bf16.msra.mxu0 0
    %1708 = vmatpush.bf16.msra.mxu0 0
    %1709 = vmatpush.bf16.msra.mxu0 0
    %1710 = vmatpush.bf16.msra.mxu0 0
    %1711 = vmatpush.bf16.msra.mxu0 0
    %1712 = vmatpush.bf16.msra.mxu0 0
    %1713 = vmatpush.bf16.msra.mxu0 0
    %1714 = vmatpush.bf16.msra.mxu0 %v1702
    %1715 = vmatmul.bf16.gmra.mxu0 %v1705
    %v1716 = vpop.f32.mrf.mxu0
    %v1717 = vadd.f32 0.0, %v1716
    %v1718 = vpop.f32.mrf.mxu0
    %v1719 = vadd.f32 0.0, %v1718
    %1720 = vdwg.mxu0
    %v1723 = vunpack.c.l.b16 %v1690
    %v1724 = vunpack.c.l.b16 %v1691
    %v1725 = vpack.c.b16 %v1724, %v1723
    %1726 = vrot.lane.b32.xlu0 %v706, 80
    %v1727 = vpop.permute.xlu0 %1726
    %v1730 = vsel %vm454, %v1725, 0
    %1732 = vmatpush.bf16.msra.mxu0 0
    %1733 = vmatpush.bf16.msra.mxu0 0
    %1734 = vmatpush.bf16.msra.mxu0 0
    %1735 = vmatpush.bf16.msra.mxu0 0
    %1736 = vmatpush.bf16.msra.mxu0 0
    %1737 = vmatpush.bf16.msra.mxu0 0
    %1738 = vmatpush.bf16.msra.mxu0 0
    %1739 = vmatpush.bf16.msra.mxu0 %v1727
    %1740 = vmatmul.bf16.gmra.mxu0 %v1730
    %v1741 = vpop.f32.mrf.mxu0
    %v1742 = vadd.f32 0.0, %v1741
    %v1743 = vpop.f32.mrf.mxu0
    %v1744 = vadd.f32 0.0, %v1743
    %1745 = vdwg.mxu0
    %v1748 = vunpack.c.l.b16 %v1692
    %v1749 = vunpack.c.l.b16 %v1693
    %v1750 = vpack.c.b16 %v1749, %v1748
    %1751 = vrot.lane.b32.xlu0 %v734, 80
    %v1752 = vpop.permute.xlu0 %1751
    %v1755 = vsel %vm454, %v1750, 0
    %1757 = vmatpush.bf16.msra.mxu0 0
    %1758 = vmatpush.bf16.msra.mxu0 0
    %1759 = vmatpush.bf16.msra.mxu0 0
    %1760 = vmatpush.bf16.msra.mxu0 0
    %1761 = vmatpush.bf16.msra.mxu0 0
    %1762 = vmatpush.bf16.msra.mxu0 0
    %1763 = vmatpush.bf16.msra.mxu0 0
    %1764 = vmatpush.bf16.msra.mxu0 %v1752
    %1765 = vmatmul.bf16.gmra.mxu0 %v1755
    %v1766 = vpop.f32.mrf.mxu0
    %v1767 = vadd.f32 0.0, %v1766
    %v1768 = vpop.f32.mrf.mxu0
    %v1769 = vadd.f32 0.0, %v1768
    %1770 = vdwg.mxu0
    %v1773 = vunpack.c.l.b16 %v1694
    %v1774 = vunpack.c.l.b16 %v1695
    %v1775 = vpack.c.b16 %v1774, %v1773
    %1776 = vrot.lane.b32.xlu0 %v762, 80
    %v1777 = vpop.permute.xlu0 %1776
    %v1780 = vsel %vm454, %v1775, 0
    %1782 = vmatpush.bf16.msra.mxu0 0
    %1783 = vmatpush.bf16.msra.mxu0 0
    %1784 = vmatpush.bf16.msra.mxu0 0
    %1785 = vmatpush.bf16.msra.mxu0 0
    %1786 = vmatpush.bf16.msra.mxu0 0
    %1787 = vmatpush.bf16.msra.mxu0 0
    %1788 = vmatpush.bf16.msra.mxu0 0
    %1789 = vmatpush.bf16.msra.mxu0 %v1777
    %1790 = vmatmul.bf16.gmra.mxu0 %v1780
    %v1791 = vpop.f32.mrf.mxu0
    %v1792 = vadd.f32 0.0, %v1791
    %v1793 = vpop.f32.mrf.mxu0
    %v1794 = vadd.f32 0.0, %v1793
    %1795 = vdwg.mxu0
    %v1796 = vpack.c.bf16 %v1717, %v1717
    %v1797 = vpack.c.bf16 %v1719, %v1719
    %v1798 = vpack.c.bf16 %v1742, %v1742
    %v1799 = vpack.c.bf16 %v1744, %v1744
    %v1800 = vpack.c.bf16 %v1767, %v1767
    %v1801 = vpack.c.bf16 %v1769, %v1769
    %v1802 = vpack.c.bf16 %v1792, %v1792
    %v1803 = vpack.c.bf16 %v1794, %v1794
    %1812 = vrot.lane.b32.xlu0 %v1796, 48
    %v1813 = vpop.permute.xlu0 %1812
    %1814 = vrot.lane.b32.xlu0 %v1797, 48
    %v1815 = vpop.permute.xlu0 %1814
    %1816 = vrot.lane.b32.xlu0 %v1798, 48
    %v1817 = vpop.permute.xlu0 %1816
    %1818 = vrot.lane.b32.xlu0 %v1799, 48
    %v1819 = vpop.permute.xlu0 %1818
    %1820 = vrot.lane.b32.xlu0 %v1800, 48
    %v1821 = vpop.permute.xlu0 %1820
    %1822 = vrot.lane.b32.xlu0 %v1801, 48
    %v1823 = vpop.permute.xlu0 %1822
    %1824 = vrot.lane.b32.xlu0 %v1802, 48
    %v1825 = vpop.permute.xlu0 %1824
    %1826 = vrot.lane.b32.xlu0 %v1803, 48
    %v1827 = vpop.permute.xlu0 %1826
    %vm1836 = vcmask 519552
    %1837 = vst.msk [vmem:[#allocation2] sm:$0xf] %vm1836, %v1813
    %1838 = vst.msk [vmem:[#allocation2 + $0x4] sm:$0xf] %vm1836, %v1815
    %1839 = vst.msk [vmem:[#allocation2 + $0x8] sm:$0xf] %vm1836, %v1817
    %1840 = vst.msk [vmem:[#allocation2 + $0xc] sm:$0xf] %vm1836, %v1819
    %1841 = vst.msk [vmem:[#allocation2 + $0x10] sm:$0xf] %vm1836, %v1821
    %1842 = vst.msk [vmem:[#allocation2 + $0x14] sm:$0xf] %vm1836, %v1823
    %1843 = vst.msk [vmem:[#allocation2 + $0x18] sm:$0xf] %vm1836, %v1825
    %1844 = vst.msk [vmem:[#allocation2 + $0x1c] sm:$0xf] %vm1836, %v1827
    %v1845 = vld [vmem:[#allocation2] sm:$0xf]
    %v1846 = vld [vmem:[#allocation2 + $0x4] sm:$0xf]
    %v1847 = vld [vmem:[#allocation2 + $0x8] sm:$0xf]
    %v1848 = vld [vmem:[#allocation2 + $0xc] sm:$0xf]
    %v1849 = vld [vmem:[#allocation2 + $0x10] sm:$0xf]
    %v1850 = vld [vmem:[#allocation2 + $0x14] sm:$0xf]
    %v1851 = vld [vmem:[#allocation2 + $0x18] sm:$0xf]
    %v1852 = vld [vmem:[#allocation2 + $0x1c] sm:$0xf]
    %v1853 = vld [vmem:[#allocation9] sm:$0xf]
    %v1854 = vld [vmem:[#allocation9 + $0x4] sm:$0xf]
    %v1855 = vld [vmem:[#allocation9 + $0x8] sm:$0xf]
    %v1856 = vld [vmem:[#allocation9 + $0xc] sm:$0xf]
    %v1857 = vld [vmem:[#allocation9 + $0x10] sm:$0xf]
    %v1858 = vld [vmem:[#allocation9 + $0x14] sm:$0xf]
    %v1859 = vld [vmem:[#allocation9 + $0x18] sm:$0xf]
    %v1860 = vld [vmem:[#allocation9 + $0x1c] sm:$0xf]
    %v1861 = vld [vmem:[#allocation9 + $0x20] sm:$0xf]
    %v1862 = vld [vmem:[#allocation9 + $0x24] sm:$0xf]
    %v1863 = vld [vmem:[#allocation9 + $0x28] sm:$0xf]
    %v1864 = vld [vmem:[#allocation9 + $0x2c] sm:$0xf]
    %v1865 = vld [vmem:[#allocation9 + $0x30] sm:$0xf]
    %v1866 = vld [vmem:[#allocation9 + $0x34] sm:$0xf]
    %v1867 = vld [vmem:[#allocation9 + $0x38] sm:$0xf]
    %v1868 = vld [vmem:[#allocation9 + $0x3c] sm:$0xf]
    %v1869 = vld [vmem:[%s4] sm:$0x1]
    %v1871 = vperm.slane %v1869, 0
    %v1881 = vunpack.c.l.b16 %v1845
    %v1882 = vunpack.c.l.b16 %v1846
    %v1883 = vunpack.c.l.b16 %v1847
    %v1884 = vunpack.c.l.b16 %v1848
    %v1885 = vunpack.c.l.b16 %v1849
    %v1886 = vunpack.c.l.b16 %v1850
    %v1887 = vunpack.c.l.b16 %v1851
    %v1888 = vunpack.c.l.b16 %v1852
    %v1889 = vpack.c.b16 %v1882, %v1881
    %v1890 = vpack.c.b16 %v1884, %v1883
    %v1891 = vpack.c.b16 %v1886, %v1885
    %v1892 = vpack.c.b16 %v1888, %v1887
    %v1913 = vunpack.c.l.b16 %v1853
    %v1914 = vunpack.c.l.b16 %v1854
    %v1915 = vunpack.c.l.b16 %v1855
    %v1916 = vunpack.c.l.b16 %v1856
    %v1917 = vunpack.c.l.b16 %v1857
    %v1918 = vunpack.c.l.b16 %v1858
    %v1919 = vunpack.c.l.b16 %v1859
    %v1920 = vunpack.c.l.b16 %v1860
    %v1921 = vunpack.c.l.b16 %v1861
    %v1922 = vunpack.c.l.b16 %v1862
    %v1923 = vunpack.c.l.b16 %v1863
    %v1924 = vunpack.c.l.b16 %v1864
    %v1925 = vunpack.c.l.b16 %v1865
    %v1926 = vunpack.c.l.b16 %v1866
    %v1927 = vunpack.c.l.b16 %v1867
    %v1928 = vunpack.c.l.b16 %v1868
    %v1929 = vpack.c.b16 %v1914, %v1913
    %v1930 = vpack.c.b16 %v1916, %v1915
    %v1931 = vpack.c.b16 %v1918, %v1917
    %v1932 = vpack.c.b16 %v1920, %v1919
    %v1933 = vpack.c.b16 %v1922, %v1921
    %v1934 = vpack.c.b16 %v1924, %v1923
    %v1935 = vpack.c.b16 %v1926, %v1925
    %v1936 = vpack.c.b16 %v1928, %v1927
    %1945 = vmatpush.bf16.msra.mxu0 %v1936
    %1946 = vmatpush.bf16.msra.mxu0 %v1935
    %1947 = vmatpush.bf16.msra.mxu0 %v1934
    %1948 = vmatpush.bf16.msra.mxu0 %v1933
    %1949 = vmatpush.bf16.msra.mxu0 %v1932
    %1950 = vmatpush.bf16.msra.mxu0 %v1931
    %1951 = vmatpush.bf16.msra.mxu0 %v1930
    %1952 = vmatpush.bf16.msra.mxu0 %v1929
    %1953 = vmatmul.bf16.gmra.mxu0 %v1889
    %v1954 = vpop.f32.mrf.mxu0
    %v1955 = vadd.f32 %v1871, %v1954
    %v1956 = vpop.f32.mrf.mxu0
    %v1957 = vadd.f32 %v1871, %v1956
    %1958 = vmatmul.bf16.gmra.mxu0 %v1890
    %v1959 = vpop.f32.mrf.mxu0
    %v1960 = vadd.f32 %v1871, %v1959
    %v1961 = vpop.f32.mrf.mxu0
    %v1962 = vadd.f32 %v1871, %v1961
    %1963 = vmatmul.bf16.gmra.mxu0 %v1891
    %v1964 = vpop.f32.mrf.mxu0
    %v1965 = vadd.f32 %v1871, %v1964
    %v1966 = vpop.f32.mrf.mxu0
    %v1967 = vadd.f32 %v1871, %v1966
    %1968 = vmatmul.bf16.gmra.mxu0 %v1892
    %v1969 = vpop.f32.mrf.mxu0
    %v1970 = vadd.f32 %v1871, %v1969
    %v1971 = vpop.f32.mrf.mxu0
    %v1972 = vadd.f32 %v1871, %v1971
    %1973 = vdwg.mxu0
    %v1974 = vadd.f32 %v1955, %v124
    %v1975 = vadd.f32 %v1957, %v125
    %v1976 = vadd.f32 %v1960, %v126
    %v1977 = vadd.f32 %v1962, %v127
    %v1978 = vadd.f32 %v1965, %v128
    %v1979 = vadd.f32 %v1967, %v129
    %v1980 = vadd.f32 %v1970, %v130
    %v1981 = vadd.f32 %v1972, %v131
    %v1982 = vld [vmem:[%s5] sm:$0x1]
    %v1983 = vld [vmem:[%s6] sm:$0x1]
    %1984 = vadd.xlane.f32.xlu0 %v1974
    %v1985 = vpop.xlane.xlu0 %1984
    %1986 = vadd.xlane.f32.xlu0 %v1975
    %v1987 = vpop.xlane.xlu0 %1986
    %1988 = vadd.xlane.f32.xlu0 %v1976
    %v1989 = vpop.xlane.xlu0 %1988
    %1990 = vadd.xlane.f32.xlu0 %v1977
    %v1991 = vpop.xlane.xlu0 %1990
    %1992 = vadd.xlane.f32.xlu0 %v1978
    %v1993 = vpop.xlane.xlu0 %1992
    %1994 = vadd.xlane.f32.xlu0 %v1979
    %v1995 = vpop.xlane.xlu0 %1994
    %1996 = vadd.xlane.f32.xlu0 %v1980
    %v1997 = vpop.xlane.xlu0 %1996
    %1998 = vadd.xlane.f32.xlu0 %v1981
    %v1999 = vpop.xlane.xlu0 %1998
    %v2000 = vmul.f32 %v1985, 0.03125
    %v2001 = vmul.f32 %v1987, 0.03125
    %v2002 = vmul.f32 %v1989, 0.03125
    %v2003 = vmul.f32 %v1991, 0.03125
    %v2004 = vmul.f32 %v1993, 0.03125
    %v2005 = vmul.f32 %v1995, 0.03125
    %v2006 = vmul.f32 %v1997, 0.03125
    %v2007 = vmul.f32 %v1999, 0.03125
    %v2008 = vmul.f32 %v1974, %v1974
    %v2009 = vmul.f32 %v1975, %v1975
    %v2010 = vmul.f32 %v1976, %v1976
    %v2011 = vmul.f32 %v1977, %v1977
    %v2012 = vmul.f32 %v1978, %v1978
    %v2013 = vmul.f32 %v1979, %v1979
    %v2014 = vmul.f32 %v1980, %v1980
    %v2015 = vmul.f32 %v1981, %v1981
    %2016 = vadd.xlane.f32.xlu0 %v2008
    %v2017 = vpop.xlane.xlu0 %2016
    %2018 = vadd.xlane.f32.xlu0 %v2009
    %v2019 = vpop.xlane.xlu0 %2018
    %2020 = vadd.xlane.f32.xlu0 %v2010
    %v2021 = vpop.xlane.xlu0 %2020
    %2022 = vadd.xlane.f32.xlu0 %v2011
    %v2023 = vpop.xlane.xlu0 %2022
    %2024 = vadd.xlane.f32.xlu0 %v2012
    %v2025 = vpop.xlane.xlu0 %2024
    %2026 = vadd.xlane.f32.xlu0 %v2013
    %v2027 = vpop.xlane.xlu0 %2026
    %2028 = vadd.xlane.f32.xlu0 %v2014
    %v2029 = vpop.xlane.xlu0 %2028
    %2030 = vadd.xlane.f32.xlu0 %v2015
    %v2031 = vpop.xlane.xlu0 %2030
    %v2032 = vmul.f32 %v2017, 0.03125
    %v2033 = vmul.f32 %v2019, 0.03125
    %v2034 = vmul.f32 %v2021, 0.03125
    %v2035 = vmul.f32 %v2023, 0.03125
    %v2036 = vmul.f32 %v2025, 0.03125
    %v2037 = vmul.f32 %v2027, 0.03125
    %v2038 = vmul.f32 %v2029, 0.03125
    %v2039 = vmul.f32 %v2031, 0.03125
    %v2040 = vmul.f32 %v2000, %v2000
    %v2041 = vmul.f32 %v2001, %v2001
    %v2042 = vmul.f32 %v2002, %v2002
    %v2043 = vmul.f32 %v2003, %v2003
    %v2044 = vmul.f32 %v2004, %v2004
    %v2045 = vmul.f32 %v2005, %v2005
    %v2046 = vmul.f32 %v2006, %v2006
    %v2047 = vmul.f32 %v2007, %v2007
    %v2048 = vsub.f32 %v2032, %v2040
    %v2049 = vsub.f32 %v2033, %v2041
    %v2050 = vsub.f32 %v2034, %v2042
    %v2051 = vsub.f32 %v2035, %v2043
    %v2052 = vsub.f32 %v2036, %v2044
    %v2053 = vsub.f32 %v2037, %v2045
    %v2054 = vsub.f32 %v2038, %v2046
    %v2055 = vsub.f32 %v2039, %v2047
    %v2056 = vmax.f32 %v2048, 0.0
    %v2057 = vmax.f32 %v2049, 0.0
    %v2058 = vmax.f32 %v2050, 0.0
    %v2059 = vmax.f32 %v2051, 0.0
    %v2060 = vmax.f32 %v2052, 0.0
    %v2061 = vmax.f32 %v2053, 0.0
    %v2062 = vmax.f32 %v2054, 0.0
    %v2063 = vmax.f32 %v2055, 0.0
    %v2064 = vsub.f32 %v1974, %v2000
    %v2065 = vsub.f32 %v1975, %v2001
    %v2066 = vsub.f32 %v1976, %v2002
    %v2067 = vsub.f32 %v1977, %v2003
    %v2068 = vsub.f32 %v1978, %v2004
    %v2069 = vsub.f32 %v1979, %v2005
    %v2070 = vsub.f32 %v1980, %v2006
    %v2071 = vsub.f32 %v1981, %v2007
    %v2072 = vadd.f32 %v2056, 1e-05
    %v2073 = vadd.f32 %v2057, 1e-05
    %v2074 = vadd.f32 %v2058, 1e-05
    %v2075 = vadd.f32 %v2059, 1e-05
    %v2076 = vadd.f32 %v2060, 1e-05
    %v2077 = vadd.f32 %v2061, 1e-05
    %v2078 = vadd.f32 %v2062, 1e-05
    %v2079 = vadd.f32 %v2063, 1e-05
    %v2080 = vrsqrt.pop %v2072
    %v2081 = vmul.f32 %v2080, %v2072
    %v2082 = vmul.f32 %v2081, %v2080
    %v2083 = vmul.f32 0.5, %v2082
    %v2084 = vsub.f32 1.5, %v2083
    %v2085 = vmul.f32 %v2080, %v2084
    %vm2086 = vweird.f32 %v2072
    %vm2087 = vweird.f32 %v2080
    %vm2088 = vmor %vm2086, %vm2087
    %v2089 = vsel %vm2088, %v2080, %v2085
    %v2090 = vrsqrt.pop %v2073
    %v2091 = vmul.f32 %v2090, %v2073
    %v2092 = vmul.f32 %v2091, %v2090
    %v2093 = vmul.f32 0.5, %v2092
    %v2094 = vsub.f32 1.5, %v2093
    %v2095 = vmul.f32 %v2090, %v2094
    %vm2096 = vweird.f32 %v2073
    %vm2097 = vweird.f32 %v2090
    %vm2098 = vmor %vm2096, %vm2097
    %v2099 = vsel %vm2098, %v2090, %v2095
    %v2100 = vrsqrt.pop %v2074
    %v2101 = vmul.f32 %v2100, %v2074
    %v2102 = vmul.f32 %v2101, %v2100
    %v2103 = vmul.f32 0.5, %v2102
    %v2104 = vsub.f32 1.5, %v2103
    %v2105 = vmul.f32 %v2100, %v2104
    %vm2106 = vweird.f32 %v2074
    %vm2107 = vweird.f32 %v2100
    %vm2108 = vmor %vm2106, %vm2107
    %v2109 = vsel %vm2108, %v2100, %v2105
    %v2110 = vrsqrt.pop %v2075
    %v2111 = vmul.f32 %v2110, %v2075
    %v2112 = vmul.f32 %v2111, %v2110
    %v2113 = vmul.f32 0.5, %v2112
    %v2114 = vsub.f32 1.5, %v2113
    %v2115 = vmul.f32 %v2110, %v2114
    %vm2116 = vweird.f32 %v2075
    %vm2117 = vweird.f32 %v2110
    %vm2118 = vmor %vm2116, %vm2117
    %v2119 = vsel %vm2118, %v2110, %v2115
    %v2120 = vrsqrt.pop %v2076
    %v2121 = vmul.f32 %v2120, %v2076
    %v2122 = vmul.f32 %v2121, %v2120
    %v2123 = vmul.f32 0.5, %v2122
    %v2124 = vsub.f32 1.5, %v2123
    %v2125 = vmul.f32 %v2120, %v2124
    %vm2126 = vweird.f32 %v2076
    %vm2127 = vweird.f32 %v2120
    %vm2128 = vmor %vm2126, %vm2127
    %v2129 = vsel %vm2128, %v2120, %v2125
    %v2130 = vrsqrt.pop %v2077
    %v2131 = vmul.f32 %v2130, %v2077
    %v2132 = vmul.f32 %v2131, %v2130
    %v2133 = vmul.f32 0.5, %v2132
    %v2134 = vsub.f32 1.5, %v2133
    %v2135 = vmul.f32 %v2130, %v2134
    %vm2136 = vweird.f32 %v2077
    %vm2137 = vweird.f32 %v2130
    %vm2138 = vmor %vm2136, %vm2137
    %v2139 = vsel %vm2138, %v2130, %v2135
    %v2140 = vrsqrt.pop %v2078
    %v2141 = vmul.f32 %v2140, %v2078
    %v2142 = vmul.f32 %v2141, %v2140
    %v2143 = vmul.f32 0.5, %v2142
    %v2144 = vsub.f32 1.5, %v2143
    %v2145 = vmul.f32 %v2140, %v2144
    %vm2146 = vweird.f32 %v2078
    %vm2147 = vweird.f32 %v2140
    %vm2148 = vmor %vm2146, %vm2147
    %v2149 = vsel %vm2148, %v2140, %v2145
    %v2150 = vrsqrt.pop %v2079
    %v2151 = vmul.f32 %v2150, %v2079
    %v2152 = vmul.f32 %v2151, %v2150
    %v2153 = vmul.f32 0.5, %v2152
    %v2154 = vsub.f32 1.5, %v2153
    %v2155 = vmul.f32 %v2150, %v2154
    %vm2156 = vweird.f32 %v2079
    %vm2157 = vweird.f32 %v2150
    %vm2158 = vmor %vm2156, %vm2157
    %v2159 = vsel %vm2158, %v2150, %v2155
    %v2160 = vmul.f32 %v2064, %v2089
    %v2161 = vmul.f32 %v2065, %v2099
    %v2162 = vmul.f32 %v2066, %v2109
    %v2163 = vmul.f32 %v2067, %v2119
    %v2164 = vmul.f32 %v2068, %v2129
    %v2165 = vmul.f32 %v2069, %v2139
    %v2166 = vmul.f32 %v2070, %v2149
    %v2167 = vmul.f32 %v2071, %v2159
    %v2169 = vperm.slane %v1982, 0
    %v2171 = vmul.f32 %v2160, %v2169
    %v2172 = vmul.f32 %v2161, %v2169
    %v2173 = vmul.f32 %v2162, %v2169
    %v2174 = vmul.f32 %v2163, %v2169
    %v2175 = vmul.f32 %v2164, %v2169
    %v2176 = vmul.f32 %v2165, %v2169
    %v2177 = vmul.f32 %v2166, %v2169
    %v2178 = vmul.f32 %v2167, %v2169
    %v2180 = vperm.slane %v1983, 0
    %v2182 = vadd.f32 %v2171, %v2180
    %v2183 = vadd.f32 %v2172, %v2180
    %v2184 = vadd.f32 %v2173, %v2180
    %v2185 = vadd.f32 %v2174, %v2180
    %v2186 = vadd.f32 %v2175, %v2180
    %v2187 = vadd.f32 %v2176, %v2180
    %v2188 = vadd.f32 %v2177, %v2180
    %v2189 = vadd.f32 %v2178, %v2180
    %v2190 = vpack.c.bf16 %v2183, %v2182
    %v2191 = vpack.c.bf16 %v2185, %v2184
    %v2192 = vpack.c.bf16 %v2187, %v2186
    %v2193 = vpack.c.bf16 %v2189, %v2188
    %v2194 = vld [vmem:[#allocation11] sm:$0xf]
    %v2195 = vld [vmem:[#allocation11 + $0x4] sm:$0xf]
    %v2196 = vld [vmem:[#allocation11 + $0x8] sm:$0xf]
    %v2197 = vld [vmem:[#allocation11 + $0xc] sm:$0xf]
    %v2198 = vld [vmem:[#allocation11 + $0x10] sm:$0xf]
    %v2199 = vld [vmem:[#allocation11 + $0x14] sm:$0xf]
    %v2200 = vld [vmem:[#allocation11 + $0x18] sm:$0xf]
    %v2201 = vld [vmem:[#allocation11 + $0x1c] sm:$0xf]
    %v2202 = vld [vmem:[#allocation11 + $0x20] sm:$0xf]
    %v2203 = vld [vmem:[#allocation11 + $0x24] sm:$0xf]
    %v2204 = vld [vmem:[#allocation11 + $0x28] sm:$0xf]
    %v2205 = vld [vmem:[#allocation11 + $0x2c] sm:$0xf]
    %v2206 = vld [vmem:[#allocation11 + $0x30] sm:$0xf]
    %v2207 = vld [vmem:[#allocation11 + $0x34] sm:$0xf]
    %v2208 = vld [vmem:[#allocation11 + $0x38] sm:$0xf]
    %v2209 = vld [vmem:[#allocation11 + $0x3c] sm:$0xf]
    %v2210 = vld [vmem:[%s8] sm:$0x1]
    %v2212 = vperm.slane %v2210, 0
    %v2230 = vunpack.c.l.b16 %v2194
    %v2231 = vunpack.c.l.b16 %v2195
    %v2232 = vunpack.c.l.b16 %v2196
    %v2233 = vunpack.c.l.b16 %v2197
    %v2234 = vunpack.c.l.b16 %v2198
    %v2235 = vunpack.c.l.b16 %v2199
    %v2236 = vunpack.c.l.b16 %v2200
    %v2237 = vunpack.c.l.b16 %v2201
    %v2238 = vunpack.c.l.b16 %v2202
    %v2239 = vunpack.c.l.b16 %v2203
    %v2240 = vunpack.c.l.b16 %v2204
    %v2241 = vunpack.c.l.b16 %v2205
    %v2242 = vunpack.c.l.b16 %v2206
    %v2243 = vunpack.c.l.b16 %v2207
    %v2244 = vunpack.c.l.b16 %v2208
    %v2245 = vunpack.c.l.b16 %v2209
    %v2246 = vpack.c.b16 %v2231, %v2230
    %v2247 = vpack.c.b16 %v2233, %v2232
    %v2248 = vpack.c.b16 %v2235, %v2234
    %v2249 = vpack.c.b16 %v2237, %v2236
    %v2250 = vpack.c.b16 %v2239, %v2238
    %v2251 = vpack.c.b16 %v2241, %v2240
    %v2252 = vpack.c.b16 %v2243, %v2242
    %v2253 = vpack.c.b16 %v2245, %v2244
    %2262 = vmatpush.bf16.msra.mxu0 %v2253
    %2263 = vmatpush.bf16.msra.mxu0 %v2252
    %2264 = vmatpush.bf16.msra.mxu0 %v2251
    %2265 = vmatpush.bf16.msra.mxu0 %v2250
    %2266 = vmatpush.bf16.msra.mxu0 %v2249
    %2267 = vmatpush.bf16.msra.mxu0 %v2248
    %2268 = vmatpush.bf16.msra.mxu0 %v2247
    %2269 = vmatpush.bf16.msra.mxu0 %v2246
    %2270 = vmatmul.bf16.gmra.mxu0 %v2190
    %v2271 = vpop.f32.mrf.mxu0
    %v2272 = vadd.f32 %v2212, %v2271
    %v2273 = vpop.f32.mrf.mxu0
    %v2274 = vadd.f32 %v2212, %v2273
    %2275 = vmatmul.bf16.gmra.mxu0 %v2191
    %v2276 = vpop.f32.mrf.mxu0
    %v2277 = vadd.f32 %v2212, %v2276
    %v2278 = vpop.f32.mrf.mxu0
    %v2279 = vadd.f32 %v2212, %v2278
    %2280 = vmatmul.bf16.gmra.mxu0 %v2192
    %v2281 = vpop.f32.mrf.mxu0
    %v2282 = vadd.f32 %v2212, %v2281
    %v2283 = vpop.f32.mrf.mxu0
    %v2284 = vadd.f32 %v2212, %v2283
    %2285 = vmatmul.bf16.gmra.mxu0 %v2193
    %v2286 = vpop.f32.mrf.mxu0
    %v2287 = vadd.f32 %v2212, %v2286
    %v2288 = vpop.f32.mrf.mxu0
    %v2289 = vadd.f32 %v2212, %v2288
    %2290 = vdwg.mxu0
    %v2291 = vadd.f32 %v2272, %v2182
    %v2292 = vadd.f32 %v2274, %v2183
    %v2293 = vadd.f32 %v2277, %v2184
    %v2294 = vadd.f32 %v2279, %v2185
    %v2295 = vadd.f32 %v2282, %v2186
    %v2296 = vadd.f32 %v2284, %v2187
    %v2297 = vadd.f32 %v2287, %v2188
    %v2298 = vadd.f32 %v2289, %v2189
    %v2299 = vld [vmem:[%s9] sm:$0x1]
    %v2300 = vld [vmem:[%s10] sm:$0x1]
    %2301 = vadd.xlane.f32.xlu0 %v2291
    %v2302 = vpop.xlane.xlu0 %2301
    %2303 = vadd.xlane.f32.xlu0 %v2292
    %v2304 = vpop.xlane.xlu0 %2303
    %2305 = vadd.xlane.f32.xlu0 %v2293
    %v2306 = vpop.xlane.xlu0 %2305
    %2307 = vadd.xlane.f32.xlu0 %v2294
    %v2308 = vpop.xlane.xlu0 %2307
    %2309 = vadd.xlane.f32.xlu0 %v2295
    %v2310 = vpop.xlane.xlu0 %2309
    %2311 = vadd.xlane.f32.xlu0 %v2296
    %v2312 = vpop.xlane.xlu0 %2311
    %2313 = vadd.xlane.f32.xlu0 %v2297
    %v2314 = vpop.xlane.xlu0 %2313
    %2315 = vadd.xlane.f32.xlu0 %v2298
    %v2316 = vpop.xlane.xlu0 %2315
    %v2317 = vmul.f32 %v2302, 0.03125
    %v2318 = vmul.f32 %v2304, 0.03125
    %v2319 = vmul.f32 %v2306, 0.03125
    %v2320 = vmul.f32 %v2308, 0.03125
    %v2321 = vmul.f32 %v2310, 0.03125
    %v2322 = vmul.f32 %v2312, 0.03125
    %v2323 = vmul.f32 %v2314, 0.03125
    %v2324 = vmul.f32 %v2316, 0.03125
    %v2325 = vmul.f32 %v2291, %v2291
    %v2326 = vmul.f32 %v2292, %v2292
    %v2327 = vmul.f32 %v2293, %v2293
    %v2328 = vmul.f32 %v2294, %v2294
    %v2329 = vmul.f32 %v2295, %v2295
    %v2330 = vmul.f32 %v2296, %v2296
    %v2331 = vmul.f32 %v2297, %v2297
    %v2332 = vmul.f32 %v2298, %v2298
    %2333 = vadd.xlane.f32.xlu0 %v2325
    %v2334 = vpop.xlane.xlu0 %2333
    %2335 = vadd.xlane.f32.xlu0 %v2326
    %v2336 = vpop.xlane.xlu0 %2335
    %2337 = vadd.xlane.f32.xlu0 %v2327
    %v2338 = vpop.xlane.xlu0 %2337
    %2339 = vadd.xlane.f32.xlu0 %v2328
    %v2340 = vpop.xlane.xlu0 %2339
    %2341 = vadd.xlane.f32.xlu0 %v2329
    %v2342 = vpop.xlane.xlu0 %2341
    %2343 = vadd.xlane.f32.xlu0 %v2330
    %v2344 = vpop.xlane.xlu0 %2343
    %2345 = vadd.xlane.f32.xlu0 %v2331
    %v2346 = vpop.xlane.xlu0 %2345
    %2347 = vadd.xlane.f32.xlu0 %v2332
    %v2348 = vpop.xlane.xlu0 %2347
    %v2349 = vmul.f32 %v2334, 0.03125
    %v2350 = vmul.f32 %v2336, 0.03125
    %v2351 = vmul.f32 %v2338, 0.03125
    %v2352 = vmul.f32 %v2340, 0.03125
    %v2353 = vmul.f32 %v2342, 0.03125
    %v2354 = vmul.f32 %v2344, 0.03125
    %v2355 = vmul.f32 %v2346, 0.03125
    %v2356 = vmul.f32 %v2348, 0.03125
    %v2357 = vmul.f32 %v2317, %v2317
    %v2358 = vmul.f32 %v2318, %v2318
    %v2359 = vmul.f32 %v2319, %v2319
    %v2360 = vmul.f32 %v2320, %v2320
    %v2361 = vmul.f32 %v2321, %v2321
    %v2362 = vmul.f32 %v2322, %v2322
    %v2363 = vmul.f32 %v2323, %v2323
    %v2364 = vmul.f32 %v2324, %v2324
    %v2365 = vsub.f32 %v2349, %v2357
    %v2366 = vsub.f32 %v2350, %v2358
    %v2367 = vsub.f32 %v2351, %v2359
    %v2368 = vsub.f32 %v2352, %v2360
    %v2369 = vsub.f32 %v2353, %v2361
    %v2370 = vsub.f32 %v2354, %v2362
    %v2371 = vsub.f32 %v2355, %v2363
    %v2372 = vsub.f32 %v2356, %v2364
    %v2373 = vmax.f32 %v2365, 0.0
    %v2374 = vmax.f32 %v2366, 0.0
    %v2375 = vmax.f32 %v2367, 0.0
    %v2376 = vmax.f32 %v2368, 0.0
    %v2377 = vmax.f32 %v2369, 0.0
    %v2378 = vmax.f32 %v2370, 0.0
    %v2379 = vmax.f32 %v2371, 0.0
    %v2380 = vmax.f32 %v2372, 0.0
    %v2381 = vsub.f32 %v2291, %v2317
    %v2382 = vsub.f32 %v2292, %v2318
    %v2383 = vsub.f32 %v2293, %v2319
    %v2384 = vsub.f32 %v2294, %v2320
    %v2385 = vsub.f32 %v2295, %v2321
    %v2386 = vsub.f32 %v2296, %v2322
    %v2387 = vsub.f32 %v2297, %v2323
    %v2388 = vsub.f32 %v2298, %v2324
    %v2389 = vadd.f32 %v2373, 1e-05
    %v2390 = vadd.f32 %v2374, 1e-05
    %v2391 = vadd.f32 %v2375, 1e-05
    %v2392 = vadd.f32 %v2376, 1e-05
    %v2393 = vadd.f32 %v2377, 1e-05
    %v2394 = vadd.f32 %v2378, 1e-05
    %v2395 = vadd.f32 %v2379, 1e-05
    %v2396 = vadd.f32 %v2380, 1e-05
    %v2397 = vrsqrt.pop %v2389
    %v2398 = vmul.f32 %v2397, %v2389
    %v2399 = vmul.f32 %v2398, %v2397
    %v2400 = vmul.f32 0.5, %v2399
    %v2401 = vsub.f32 1.5, %v2400
    %v2402 = vmul.f32 %v2397, %v2401
    %vm2403 = vweird.f32 %v2389
    %vm2404 = vweird.f32 %v2397
    %vm2405 = vmor %vm2403, %vm2404
    %v2406 = vsel %vm2405, %v2397, %v2402
    %v2407 = vrsqrt.pop %v2390
    %v2408 = vmul.f32 %v2407, %v2390
    %v2409 = vmul.f32 %v2408, %v2407
    %v2410 = vmul.f32 0.5, %v2409
    %v2411 = vsub.f32 1.5, %v2410
    %v2412 = vmul.f32 %v2407, %v2411
    %vm2413 = vweird.f32 %v2390
    %vm2414 = vweird.f32 %v2407
    %vm2415 = vmor %vm2413, %vm2414
    %v2416 = vsel %vm2415, %v2407, %v2412
    %v2417 = vrsqrt.pop %v2391
    %v2418 = vmul.f32 %v2417, %v2391
    %v2419 = vmul.f32 %v2418, %v2417
    %v2420 = vmul.f32 0.5, %v2419
    %v2421 = vsub.f32 1.5, %v2420
    %v2422 = vmul.f32 %v2417, %v2421
    %vm2423 = vweird.f32 %v2391
    %vm2424 = vweird.f32 %v2417
    %vm2425 = vmor %vm2423, %vm2424
    %v2426 = vsel %vm2425, %v2417, %v2422
    %v2427 = vrsqrt.pop %v2392
    %v2428 = vmul.f32 %v2427, %v2392
    %v2429 = vmul.f32 %v2428, %v2427
    %v2430 = vmul.f32 0.5, %v2429
    %v2431 = vsub.f32 1.5, %v2430
    %v2432 = vmul.f32 %v2427, %v2431
    %vm2433 = vweird.f32 %v2392
    %vm2434 = vweird.f32 %v2427
    %vm2435 = vmor %vm2433, %vm2434
    %v2436 = vsel %vm2435, %v2427, %v2432
    %v2437 = vrsqrt.pop %v2393
    %v2438 = vmul.f32 %v2437, %v2393
    %v2439 = vmul.f32 %v2438, %v2437
    %v2440 = vmul.f32 0.5, %v2439
    %v2441 = vsub.f32 1.5, %v2440
    %v2442 = vmul.f32 %v2437, %v2441
    %vm2443 = vweird.f32 %v2393
    %vm2444 = vweird.f32 %v2437
    %vm2445 = vmor %vm2443, %vm2444
    %v2446 = vsel %vm2445, %v2437, %v2442
    %v2447 = vrsqrt.pop %v2394
    %v2448 = vmul.f32 %v2447, %v2394
    %v2449 = vmul.f32 %v2448, %v2447
    %v2450 = vmul.f32 0.5, %v2449
    %v2451 = vsub.f32 1.5, %v2450
    %v2452 = vmul.f32 %v2447, %v2451
    %vm2453 = vweird.f32 %v2394
    %vm2454 = vweird.f32 %v2447
    %vm2455 = vmor %vm2453, %vm2454
    %v2456 = vsel %vm2455, %v2447, %v2452
    %v2457 = vrsqrt.pop %v2395
    %v2458 = vmul.f32 %v2457, %v2395
    %v2459 = vmul.f32 %v2458, %v2457
    %v2460 = vmul.f32 0.5, %v2459
    %v2461 = vsub.f32 1.5, %v2460
    %v2462 = vmul.f32 %v2457, %v2461
    %vm2463 = vweird.f32 %v2395
    %vm2464 = vweird.f32 %v2457
    %vm2465 = vmor %vm2463, %vm2464
    %v2466 = vsel %vm2465, %v2457, %v2462
    %v2467 = vrsqrt.pop %v2396
    %v2468 = vmul.f32 %v2467, %v2396
    %v2469 = vmul.f32 %v2468, %v2467
    %v2470 = vmul.f32 0.5, %v2469
    %v2471 = vsub.f32 1.5, %v2470
    %v2472 = vmul.f32 %v2467, %v2471
    %vm2473 = vweird.f32 %v2396
    %vm2474 = vweird.f32 %v2467
    %vm2475 = vmor %vm2473, %vm2474
    %v2476 = vsel %vm2475, %v2467, %v2472
    %v2477 = vmul.f32 %v2381, %v2406
    %v2478 = vmul.f32 %v2382, %v2416
    %v2479 = vmul.f32 %v2383, %v2426
    %v2480 = vmul.f32 %v2384, %v2436
    %v2481 = vmul.f32 %v2385, %v2446
    %v2482 = vmul.f32 %v2386, %v2456
    %v2483 = vmul.f32 %v2387, %v2466
    %v2484 = vmul.f32 %v2388, %v2476
    %v2486 = vperm.slane %v2299, 0
    %v2488 = vmul.f32 %v2477, %v2486
    %v2489 = vmul.f32 %v2478, %v2486
    %v2490 = vmul.f32 %v2479, %v2486
    %v2491 = vmul.f32 %v2480, %v2486
    %v2492 = vmul.f32 %v2481, %v2486
    %v2493 = vmul.f32 %v2482, %v2486
    %v2494 = vmul.f32 %v2483, %v2486
    %v2495 = vmul.f32 %v2484, %v2486
    %v2497 = vperm.slane %v2300, 0
    %v2499 = vadd.f32 %v2488, %v2497
    %v2500 = vadd.f32 %v2489, %v2497
    %v2501 = vadd.f32 %v2490, %v2497
    %v2502 = vadd.f32 %v2491, %v2497
    %v2503 = vadd.f32 %v2492, %v2497
    %v2504 = vadd.f32 %v2493, %v2497
    %v2505 = vadd.f32 %v2494, %v2497
    %v2506 = vadd.f32 %v2495, %v2497
    %2507 = vst [vmem:[#allocation12] sm:$0xff] %v2499
    %2508 = vst [vmem:[#allocation12 + $0x8] sm:$0xff] %v2500
    %2509 = vst [vmem:[#allocation12 + $0x10] sm:$0xff] %v2501
    %2510 = vst [vmem:[#allocation12 + $0x18] sm:$0xff] %v2502
    %2511 = vst [vmem:[#allocation12 + $0x20] sm:$0xff] %v2503
    %2512 = vst [vmem:[#allocation12 + $0x28] sm:$0xff] %v2504
    %2513 = vst [vmem:[#allocation12 + $0x30] sm:$0xff] %v2505
    %2514 = vst [vmem:[#allocation12 + $0x38] sm:$0xff] %v2506
    // Predicated region
    $region66: #{tpu_custom_call.1} parent=1 // pred_check
      _
    $region67: #{tpu_custom_call.1} parent=1 // pred_check_branch
      %2516 = sbr.rel (0) target = $region69
    $region68: #{tpu_custom_call.1} parent=1 // pred_region
      %2518 = vsyncadd [#allocation5], 0
      %s2519 = sshll.u32 [#allocation12], 4
      %s2520 = int_to_ptr.vmem [resolvable:$true] %s2519
      %s2521 = sshll.u32 %s11, 4
      %s2522 = int_to_ptr.hbm [resolvable:$true] %s2521
      %2527 = dma.vmem_to_hbm [thread:$0]  %s2520, 1024, %s2522, [#allocation5], 128, 128, 8
    $region69: #{tpu_custom_call.1} parent=1 // pred_fallthru
      _
    // Predicated region
    $region70: #{tpu_custom_call.1} parent=1 // pred_check
      _
    $region71: #{tpu_custom_call.1} parent=1 // pred_check_branch
      %2529 = sbr.rel (0) target = $region73
    $region72: #{tpu_custom_call.1} parent=1 // pred_region
      %2531 = dma.done [#allocation5], 1024
    $region73: #{tpu_custom_call.1} parent=1 // pred_fallthru
      _
    %2532 = vsyncpa [#allocation4], 1
    %2533 = vsyncpa [#allocation7], 1
    %2534 = vsyncpa [#allocation10], 1
    %2535 = vsyncpa [#allocation5], 1

</llo_original>
